<compile_context>
chip_gen: v7x
topology: tpu7x:2x2x1
jax: 0.10.0
libtpu: 0.0.40
codegen_flags: <defaults>
</compile_context>

<pallas_src>
import jax
import jax.numpy as jnp
from jax.experimental import pallas as pl
from jax.experimental.pallas import tpu as pltpu

_EPS = 1e-5
_VMEM = pl.BlockSpec(memory_space=pltpu.MemorySpace.VMEM)


# ---------------------------------------------------------------------------
# Fused Pallas kernel
# ---------------------------------------------------------------------------
# Packed layout: pixel (n, h, w, c) -> row h, column n*(W*C) + w*C + c.
#   x_ref   : (H, L)        f32 activations, L = N*W*C (= 128 here)
#   wx_ref  : (L, 2L)       bf16  [dense-sample kh=1 | 1x1-sample] (same LHS x)
#   wtap_ref: (2, L, L)     bf16  dense-sample kh=0 / kh=2 (for shifted x)
#   wg0_ref : (2, L, L)     bf16  1x1 group-conv weights (BN folded), per branch
#   wg1_ref : (6, L, L)     bf16  3x3 group-conv weights per branch x kh
#   wfc_ref : (2, 3L, L)    bf16  K-stacked fc weights (outer BN folded)
#   b_ref   : (8, L)        f32   biases + identity-BN scale/bias
def _rep_cross_block_kernel(x_ref, wx_ref, wtap_ref, wg0_ref, wg1_ref,
                            wfc_ref, b_ref, out_ref):
    x = x_ref[...]                                    # (H, L) f32
    H, L = x.shape
    row = jax.lax.broadcasted_iota(jnp.int32, (H, L), 0)
    top = row == 0
    bot = row == H - 1

    def mm(a, w):
        # bf16 MXU operands, f32 accumulation
        return jnp.dot(a.astype(jnp.bfloat16), w,
                       preferred_element_type=jnp.float32)

    def shift_up(a):      # out[h] = a[h-1], zero at h=0     (kh = 0 tap)
        return jnp.where(top, 0.0, pltpu.roll(a, shift=1, axis=0))

    def shift_dn(a):      # out[h] = a[h+1], zero at h=H-1   (kh = 2 tap)
        return jnp.where(bot, 0.0, pltpu.roll(a, shift=H - 1, axis=0))

    def bias(i):
        return b_ref[i:i + 1, :]                      # (1, L), static index

    # --- sample convs of both branches; kh=1 tap fused with the 1x1 sample ---
    both = mm(x, wx_ref[...])                         # (H, 2L)
    s_d = both[:, :L] + mm(shift_up(x), wtap_ref[0]) + mm(shift_dn(x), wtap_ref[1])
    s_1 = both[:, L:]

    def cross_branch(s, bi):
        """CrossConv2dBlock.forward + trailing conv_bn BatchNorm (folded)."""
        pre = s + s                                   # sample + identity member
        o1 = jnp.maximum(mm(pre, wg0_ref[bi]) + bias(3 * bi), 0.0)     # 1x1+BN+ReLU
        p2 = pre + o1
        o2 = jnp.maximum(                                              # 3x3+BN+ReLU
            mm(shift_up(p2), wg1_ref[3 * bi])
            + mm(p2, wg1_ref[3 * bi + 1])
            + mm(shift_dn(p2), wg1_ref[3 * bi + 2])
            + bias(3 * bi + 1), 0.0)
        # fc over concat([s, s, o1, o2]): the duplicated `s` blocks were summed
        # at pack time; the concat is a lane-concat + single K-stacked matmul.
        cat = jnp.concatenate([s.astype(jnp.bfloat16),
                               o1.astype(jnp.bfloat16),
                               o2.astype(jnp.bfloat16)], axis=1)       # (H, 3L)
        return (jnp.dot(cat, wfc_ref[bi], preferred_element_type=jnp.float32)
                + bias(3 * bi + 2))

    d = cross_branch(s_d, 0)                          # rbr_dense
    o = cross_branch(s_1, 1)                          # rbr_1x1
    y = d + o + x * bias(6) + bias(7)                 # + identity BatchNorm
    out_ref[...] = jnp.maximum(y, 0.0)


@jax.jit
def rep_cross_block(x, w_x, w_tap, w_g0, w_g1, w_fc, b_all):
    """x: (N, H, W, C) NHWC; packed params from prepare_packed_params."""
    N, H, W, C = x.shape
    xp = jnp.transpose(x, (1, 0, 2, 3)).reshape(H, N * W * C)   # lane-dense pack
    out = pl.pallas_call(
        _rep_cross_block_kernel,
        out_shape=jax.ShapeDtypeStruct((H, N * W * C), jnp.float32),
        in_specs=[_VMEM] * 7,
        out_specs=_VMEM,
    )(xp, w_x, w_tap, w_g0, w_g1, w_fc, b_all)
    return jnp.transpose(out.reshape(H, N, W, C), (1, 0, 2, 3))


# ---------------------------------------------------------------------------
# One-time weight folding / packing (done outside the hot path)
# ---------------------------------------------------------------------------
def _fold_bn(gamma, beta, mean, var, conv_bias=None, eps=_EPS):
    """Fold `BN(conv(x) + conv_bias)` into (scale, bias) around the conv."""
    s = gamma * jax.lax.rsqrt(var + eps)
    cb = jnp.zeros_like(mean) if conv_bias is None else conv_bias
    return s, (cb - mean) * s + beta


def _pack_1x1(m, N, W):
    """(Cin, Cout) channel mix -> block-diagonal (N*W*Cin, N*W*Cout)."""
    return jnp.kron(jnp.eye(N * W, dtype=jnp.float32), m)


def _pack_3x3(w, N, W, scale=None):
    """(3,3,Cin,Cout) HWIO -> 3 packed (N*W*Cin, N*W*Cout) matrices (per kh);
    the 3 kw taps and the zero padding along w are folded into the shifted
    block structure (per image -> kron with eye(N))."""
    if scale is not None:
        w = w * scale[None, None, None, :]
    eye_n = jnp.eye(N, dtype=jnp.float32)
    mats = []
    for kh in range(3):
        b = jnp.zeros((N * W * w.shape[2], N * W * w.shape[3]), jnp.float32)
        for kw in range(3):
            dw = kw - 1
            shift = jnp.kron(eye_n, jnp.eye(W, k=-dw, dtype=jnp.float32))
            b = b + jnp.kron(shift, w[kh, kw])
        mats.append(b)
    return mats


def _pack_branch(p, N, W):
    C = p['sample_w'].shape[-1]
    sw = p['sample_w']
    if sw.shape[0] == 3:                               # dense branch: 3x3 sample
        sample = _pack_3x3(sw, N, W)                   # [kh0, kh1, kh2]
    else:                                              # 1x1 branch: 1x1 sample
        sample = [_pack_1x1(sw[0, 0], N, W)]
    s0, b0 = _fold_bn(*p['g0_bn'], conv_bias=p['g0_b'])
    g0 = _pack_1x1(p['g0_w'][0, 0] * s0[None, :], N, W)
    s1, b1 = _fold_bn(*p['g1_bn'], conv_bias=p['g1_b'])
    g1 = _pack_3x3(p['g1_w'], N, W, s1)                # [kh0, kh1, kh2]
    sf, bf = _fold_bn(*p['outer_bn'], conv_bias=p['fc_b'])
    wfc = p['fc_w'][0, 0] * sf[None, :]                # (4C, C), outer BN folded
    fc_stacked = jnp.concatenate([                     # K-stacked for [s|o1|o2]
        _pack_1x1(wfc[0:C] + wfc[C:2 * C], N, W),      # the two `s` pieces summed
        _pack_1x1(wfc[2 * C:3 * C], N, W),
        _pack_1x1(wfc[3 * C:4 * C], N, W)], axis=0)    # (3*L, L)
    NW = N * W
    biases = [jnp.tile(b0, NW), jnp.tile(b1, NW), jnp.tile(bf, NW)]
    return sample, g0, g1, fc_stacked, biases


def prepare_packed_params(params, N, W):
    bf16 = jnp.bfloat16
    d_s, d_g0, d_g1, d_fc, d_b = _pack_branch(params['dense'], N, W)
    o_s, o_g0, o_g1, o_fc, o_b = _pack_branch(params['one_by_one'], N, W)
    assert len(d_s) == 3 and len(o_s) == 1
    sid, bid = _fold_bn(*params['id_bn'])              # identity BatchNorm
    NW = N * W
    w_x = jnp.concatenate([d_s[1], o_s[0]], axis=1).astype(bf16)      # (L, 2L)
    w_tap = jnp.stack([d_s[0], d_s[2]]).astype(bf16)                  # (2, L, L)
    w_g0 = jnp.stack([d_g0, o_g0]).astype(bf16)                       # (2, L, L)
    w_g1 = jnp.stack(d_g1 + o_g1).astype(bf16)                        # (6, L, L)
    w_fc = jnp.stack([d_fc, o_fc]).astype(bf16)                       # (2, 3L, L)
    b_all = jnp.stack(d_b + o_b + [jnp.tile(sid, NW), jnp.tile(bid, NW)])  # (8, L)
    return w_x, w_tap, w_g0, w_g1, w_fc, b_all


# ---------------------------------------------------------------------------
# Parameter setup (deterministic, synthetic)
# ---------------------------------------------------------------------------
def init_bn(key, c):
    k1, k2, k3, k4 = jax.random.split(key, 4)
    gamma = 1.0 + 0.1 * jax.random.normal(k1, (c,), jnp.float32)
    beta = 0.1 * jax.random.normal(k2, (c,), jnp.float32)
    mean = 0.1 * jax.random.normal(k3, (c,), jnp.float32)
    var = jax.random.uniform(k4, (c,), jnp.float32, 0.5, 1.5)
    return gamma, beta, mean, var


def init_cross_block(key, cin, cout, sample_k, std=0.1):
    """Parameters of one CrossConv2dBlock (+ the trailing conv_bn BatchNorm)."""
    k = jax.random.split(key, 10)
    return {
        'sample_w': std * jax.random.normal(k[0], (sample_k, sample_k, cin, cout), jnp.float32),
        'g0_w': std * jax.random.normal(k[1], (1, 1, cout, cout), jnp.float32),
        'g0_b': std * jax.random.normal(k[2], (cout,), jnp.float32),
        'g0_bn': init_bn(k[3], cout),
        'g1_w': std * jax.random.normal(k[4], (3, 3, cout, cout), jnp.float32),
        'g1_b': std * jax.random.normal(k[5], (cout,), jnp.float32),
        'g1_bn': init_bn(k[6], cout),
        'fc_w': std * jax.random.normal(k[7], (1, 1, 4 * cout, cout), jnp.float32),
        'fc_b': std * jax.random.normal(k[8], (cout,), jnp.float32),
        'outer_bn': init_bn(k[9], cout),   # the BatchNorm of conv_bn()
    }


# ---------------------------------------------------------------------------
# Pure-JAX reference (lax.conv at HIGHEST precision, BN applied explicitly)
# ---------------------------------------------------------------------------
def _conv_ref(x, w, b=None):
    kh, kw = w.shape[0], w.shape[1]
    y = jax.lax.conv_general_dilated(
        x, w, (1, 1), ((kh // 2, kh // 2), (kw // 2, kw // 2)),
        dimension_numbers=('NHWC', 'HWIO', 'NHWC'),
        precision=jax.lax.Precision.HIGHEST)
    return y if b is None else y + b


def _bn_ref(x, bn):
    gamma, beta, mean, var = bn
    return (x - mean) * gamma * jax.lax.rsqrt(var + _EPS) + beta


def _cross_block_ref(x, p):
    s = _conv_ref(x, p['sample_w'])
    mid = [s, s]
    pre = s + s
    o1 = jnp.maximum(_bn_ref(_conv_ref(pre, p['g0_w'], p['g0_b']), p['g0_bn']), 0.0)
    mid.append(o1)
    pre = pre + o1
    o2 = jnp.maximum(_bn_ref(_conv_ref(pre, p['g1_w'], p['g1_b']), p['g1_bn']), 0.0)
    mid.append(o2)
    cat = jnp.concatenate(mid, axis=-1)
    return _bn_ref(_conv_ref(cat, p['fc_w'], p['fc_b']), p['outer_bn'])


def rep_cross_block_ref(x, params):
    d = _cross_block_ref(x, params['dense'])
    o = _cross_block_ref(x, params['one_by_one'])
    return jnp.maximum(d + o + _bn_ref(x, params['id_bn']), 0.0)


if __name__ == "__main__":
    key = jax.random.PRNGKey(0)
    kx, kp = jax.random.split(key)

    N, C_in, H, W = 2, 4, 16, 16
    C_out = 4   # C_out == C_in and stride == 1  =>  rbr_identity BN branch exists

    x_nchw = jax.random.normal(kx, (N, C_in, H, W), jnp.float32)   # PyTorch layout
    x = jnp.transpose(x_nchw, (0, 2, 3, 1))                        # -> NHWC

    k1, k2, k3 = jax.random.split(kp, 3)
    params = {
        'dense': init_cross_block(k1, C_in, C_out, 3),       # rbr_dense branch
        'one_by_one': init_cross_block(k2, C_in, C_out, 1),  # rbr_1x1 branch
        'id_bn': init_bn(k3, C_in),                          # rbr_identity BN
    }

    packed = prepare_packed_params(params, N, W)   # one-time BN folding / packing
    out = jax.block_until_ready(rep_cross_block(x, *packed))
    ref = rep_cross_block_ref(x, params)

    assert out.shape == (N, H, W, C_out)
    err = float(jnp.max(jnp.abs(out - ref)))
    # Kernel matmuls use bf16 MXU operands with f32 accumulation; the reference
    # uses Precision.HIGHEST, hence the tolerance (h-shifts are now exact).
    assert bool(jnp.allclose(out, ref, atol=5e-2, rtol=5e-2)), err
    print("KERNEL_OK")
</pallas_src>

<mosaic_0001>
module attributes {stable_mosaic.version = 11 : i64} {
  func.func @_rep_cross_block_kernel(%arg0: memref<16x128xf32, #tpu.memory_space<vmem>>, %arg1: memref<128x256xbf16, #tpu.memory_space<vmem>>, %arg2: memref<2x128x128xbf16, #tpu.memory_space<vmem>>, %arg3: memref<2x128x128xbf16, #tpu.memory_space<vmem>>, %arg4: memref<6x128x128xbf16, #tpu.memory_space<vmem>>, %arg5: memref<2x384x128xbf16, #tpu.memory_space<vmem>>, %arg6: memref<8x128xf32, #tpu.memory_space<vmem>>, %arg7: memref<16x128xf32, #tpu.memory_space<vmem>>) attributes {dimension_semantics = [], scalar_prefetch = 0 : i64, scratch_operands = 0 : i64, tpu.core_type = #tpu.core_type<tc>} {
    %c0 = arith.constant 0 : index
    %c0_0 = arith.constant 0 : index
    %0 = vector.load %arg0[%c0, %c0_0] : memref<16x128xf32, #tpu.memory_space<vmem>>, vector<16x128xf32>
    %1 = tpu.iota {dimensions = array<i32: 0>} : vector<16x128xi32>
    %c0_i32 = arith.constant 0 : i32
    %2 = vector.broadcast %c0_i32 : i32 to vector<16x128xi32>
    %3 = arith.cmpi eq, %1, %2 : vector<16x128xi32>
    %c15_i32 = arith.constant 15 : i32
    %4 = vector.broadcast %c15_i32 : i32 to vector<16x128xi32>
    %5 = arith.cmpi eq, %1, %4 : vector<16x128xi32>
    %c0_1 = arith.constant 0 : index
    %c0_2 = arith.constant 0 : index
    %6 = vector.load %arg1[%c0_1, %c0_2] : memref<128x256xbf16, #tpu.memory_space<vmem>>, vector<128x256xbf16>
    %7 = arith.truncf %0 : vector<16x128xf32> to vector<16x128xbf16>
    %cst = arith.constant dense<0.000000e+00> : vector<16x256xf32>
    %8 = tpu.matmul %7, %6, %cst {dimension_numbers = #tpu.dot_dimension_numbers<[1], [0], [0], [1], [0, 0, 1, 1], [], []>} : vector<16x128xbf16>, vector<128x256xbf16>, vector<16x256xf32> -> vector<16x256xf32>
    %9 = vector.extract_strided_slice %8 {offsets = [0, 0], sizes = [16, 128], strides = [1, 1]} : vector<16x256xf32> to vector<16x128xf32>
    %c1_i32 = arith.constant 1 : i32
    %10 = tpu.dynamic_rotate %0 by %c1_i32 dim 0 : vector<16x128xf32>, i32 -> vector<16x128xf32>
    %cst_3 = arith.constant 0.000000e+00 : f32
    %11 = vector.broadcast %cst_3 : f32 to vector<16x128xf32>
    %12 = arith.select %3, %11, %10 : vector<16x128xi1>, vector<16x128xf32>
    %c0_4 = arith.constant 0 : index
    %c0_5 = arith.constant 0 : index
    %c0_6 = arith.constant 0 : index
    %13 = vector.load %arg2[%c0_4, %c0_5, %c0_6] : memref<2x128x128xbf16, #tpu.memory_space<vmem>>, vector<1x128x128xbf16>
    %14 = vector.shape_cast %13 : vector<1x128x128xbf16> to vector<128x128xbf16>
    %15 = arith.truncf %12 : vector<16x128xf32> to vector<16x128xbf16>
    %cst_7 = arith.constant dense<0.000000e+00> : vector<16x128xf32>
    %16 = tpu.matmul %15, %14, %cst_7 {dimension_numbers = #tpu.dot_dimension_numbers<[1], [0], [0], [1], [0, 0, 1, 1], [], []>} : vector<16x128xbf16>, vector<128x128xbf16>, vector<16x128xf32> -> vector<16x128xf32>
    %17 = arith.addf %9, %16 : vector<16x128xf32>
    %c15_i32_8 = arith.constant 15 : i32
    %18 = tpu.dynamic_rotate %0 by %c15_i32_8 dim 0 : vector<16x128xf32>, i32 -> vector<16x128xf32>
    %cst_9 = arith.constant 0.000000e+00 : f32
    %19 = vector.broadcast %cst_9 : f32 to vector<16x128xf32>
    %20 = arith.select %5, %19, %18 : vector<16x128xi1>, vector<16x128xf32>
    %c1 = arith.constant 1 : index
    %c0_10 = arith.constant 0 : index
    %c0_11 = arith.constant 0 : index
    %21 = vector.load %arg2[%c1, %c0_10, %c0_11] : memref<2x128x128xbf16, #tpu.memory_space<vmem>>, vector<1x128x128xbf16>
    %22 = vector.shape_cast %21 : vector<1x128x128xbf16> to vector<128x128xbf16>
    %23 = arith.truncf %20 : vector<16x128xf32> to vector<16x128xbf16>
    %cst_12 = arith.constant dense<0.000000e+00> : vector<16x128xf32>
    %24 = tpu.matmul %23, %22, %cst_12 {dimension_numbers = #tpu.dot_dimension_numbers<[1], [0], [0], [1], [0, 0, 1, 1], [], []>} : vector<16x128xbf16>, vector<128x128xbf16>, vector<16x128xf32> -> vector<16x128xf32>
    %25 = arith.addf %17, %24 : vector<16x128xf32>
    %26 = vector.extract_strided_slice %8 {offsets = [0, 128], sizes = [16, 128], strides = [1, 1]} : vector<16x256xf32> to vector<16x128xf32>
    %27 = arith.addf %25, %25 : vector<16x128xf32>
    %c0_13 = arith.constant 0 : index
    %c0_14 = arith.constant 0 : index
    %c0_15 = arith.constant 0 : index
    %28 = vector.load %arg3[%c0_13, %c0_14, %c0_15] : memref<2x128x128xbf16, #tpu.memory_space<vmem>>, vector<1x128x128xbf16>
    %29 = vector.shape_cast %28 : vector<1x128x128xbf16> to vector<128x128xbf16>
    %30 = arith.truncf %27 : vector<16x128xf32> to vector<16x128xbf16>
    %cst_16 = arith.constant dense<0.000000e+00> : vector<16x128xf32>
    %31 = tpu.matmul %30, %29, %cst_16 {dimension_numbers = #tpu.dot_dimension_numbers<[1], [0], [0], [1], [0, 0, 1, 1], [], []>} : vector<16x128xbf16>, vector<128x128xbf16>, vector<16x128xf32> -> vector<16x128xf32>
    %c0_17 = arith.constant 0 : index
    %c0_18 = arith.constant 0 : index
    %32 = vector.load %arg6[%c0_17, %c0_18] : memref<8x128xf32, #tpu.memory_space<vmem>>, vector<1x128xf32>
    %33 = vector.broadcast %32 : vector<1x128xf32> to vector<16x128xf32>
    %34 = arith.addf %31, %33 : vector<16x128xf32>
    %cst_19 = arith.constant 0.000000e+00 : f32
    %35 = vector.broadcast %cst_19 : f32 to vector<16x128xf32>
    %36 = arith.maximumf %34, %35 : vector<16x128xf32>
    %37 = arith.addf %27, %36 : vector<16x128xf32>
    %c1_i32_20 = arith.constant 1 : i32
    %38 = tpu.dynamic_rotate %37 by %c1_i32_20 dim 0 : vector<16x128xf32>, i32 -> vector<16x128xf32>
    %cst_21 = arith.constant 0.000000e+00 : f32
    %39 = vector.broadcast %cst_21 : f32 to vector<16x128xf32>
    %40 = arith.select %3, %39, %38 : vector<16x128xi1>, vector<16x128xf32>
    %c0_22 = arith.constant 0 : index
    %c0_23 = arith.constant 0 : index
    %c0_24 = arith.constant 0 : index
    %41 = vector.load %arg4[%c0_22, %c0_23, %c0_24] : memref<6x128x128xbf16, #tpu.memory_space<vmem>>, vector<1x128x128xbf16>
    %42 = vector.shape_cast %41 : vector<1x128x128xbf16> to vector<128x128xbf16>
    %43 = arith.truncf %40 : vector<16x128xf32> to vector<16x128xbf16>
    %cst_25 = arith.constant dense<0.000000e+00> : vector<16x128xf32>
    %44 = tpu.matmul %43, %42, %cst_25 {dimension_numbers = #tpu.dot_dimension_numbers<[1], [0], [0], [1], [0, 0, 1, 1], [], []>} : vector<16x128xbf16>, vector<128x128xbf16>, vector<16x128xf32> -> vector<16x128xf32>
    %c1_26 = arith.constant 1 : index
    %c0_27 = arith.constant 0 : index
    %c0_28 = arith.constant 0 : index
    %45 = vector.load %arg4[%c1_26, %c0_27, %c0_28] : memref<6x128x128xbf16, #tpu.memory_space<vmem>>, vector<1x128x128xbf16>
    %46 = vector.shape_cast %45 : vector<1x128x128xbf16> to vector<128x128xbf16>
    %47 = arith.truncf %37 : vector<16x128xf32> to vector<16x128xbf16>
    %cst_29 = arith.constant dense<0.000000e+00> : vector<16x128xf32>
    %48 = tpu.matmul %47, %46, %cst_29 {dimension_numbers = #tpu.dot_dimension_numbers<[1], [0], [0], [1], [0, 0, 1, 1], [], []>} : vector<16x128xbf16>, vector<128x128xbf16>, vector<16x128xf32> -> vector<16x128xf32>
    %49 = arith.addf %44, %48 : vector<16x128xf32>
    %c15_i32_30 = arith.constant 15 : i32
    %50 = tpu.dynamic_rotate %37 by %c15_i32_30 dim 0 : vector<16x128xf32>, i32 -> vector<16x128xf32>
    %cst_31 = arith.constant 0.000000e+00 : f32
    %51 = vector.broadcast %cst_31 : f32 to vector<16x128xf32>
    %52 = arith.select %5, %51, %50 : vector<16x128xi1>, vector<16x128xf32>
    %c2 = arith.constant 2 : index
    %c0_32 = arith.constant 0 : index
    %c0_33 = arith.constant 0 : index
    %53 = vector.load %arg4[%c2, %c0_32, %c0_33] : memref<6x128x128xbf16, #tpu.memory_space<vmem>>, vector<1x128x128xbf16>
    %54 = vector.shape_cast %53 : vector<1x128x128xbf16> to vector<128x128xbf16>
    %55 = arith.truncf %52 : vector<16x128xf32> to vector<16x128xbf16>
    %cst_34 = arith.constant dense<0.000000e+00> : vector<16x128xf32>
    %56 = tpu.matmul %55, %54, %cst_34 {dimension_numbers = #tpu.dot_dimension_numbers<[1], [0], [0], [1], [0, 0, 1, 1], [], []>} : vector<16x128xbf16>, vector<128x128xbf16>, vector<16x128xf32> -> vector<16x128xf32>
    %57 = arith.addf %49, %56 : vector<16x128xf32>
    %c1_35 = arith.constant 1 : index
    %c0_36 = arith.constant 0 : index
    %58 = vector.load %arg6[%c1_35, %c0_36] : memref<8x128xf32, #tpu.memory_space<vmem>>, vector<1x128xf32>
    %59 = vector.broadcast %58 : vector<1x128xf32> to vector<16x128xf32>
    %60 = arith.addf %57, %59 : vector<16x128xf32>
    %cst_37 = arith.constant 0.000000e+00 : f32
    %61 = vector.broadcast %cst_37 : f32 to vector<16x128xf32>
    %62 = arith.maximumf %60, %61 : vector<16x128xf32>
    %63 = arith.truncf %25 : vector<16x128xf32> to vector<16x128xbf16>
    %64 = arith.truncf %36 : vector<16x128xf32> to vector<16x128xbf16>
    %65 = arith.truncf %62 : vector<16x128xf32> to vector<16x128xbf16>
    %66 = tpu.concatenate %63, %64, %65 in 1 : vector<16x128xbf16>, vector<16x128xbf16>, vector<16x128xbf16> -> vector<16x384xbf16>
    %c0_38 = arith.constant 0 : index
    %c0_39 = arith.constant 0 : index
    %c0_40 = arith.constant 0 : index
    %67 = vector.load %arg5[%c0_38, %c0_39, %c0_40] : memref<2x384x128xbf16, #tpu.memory_space<vmem>>, vector<1x384x128xbf16>
    %68 = vector.shape_cast %67 : vector<1x384x128xbf16> to vector<384x128xbf16>
    %cst_41 = arith.constant dense<0.000000e+00> : vector<16x128xf32>
    %69 = tpu.matmul %66, %68, %cst_41 {dimension_numbers = #tpu.dot_dimension_numbers<[1], [0], [0], [1], [0, 0, 1, 1], [], []>} : vector<16x384xbf16>, vector<384x128xbf16>, vector<16x128xf32> -> vector<16x128xf32>
    %c2_42 = arith.constant 2 : index
    %c0_43 = arith.constant 0 : index
    %70 = vector.load %arg6[%c2_42, %c0_43] : memref<8x128xf32, #tpu.memory_space<vmem>>, vector<1x128xf32>
    %71 = vector.broadcast %70 : vector<1x128xf32> to vector<16x128xf32>
    %72 = arith.addf %69, %71 : vector<16x128xf32>
    %73 = arith.addf %26, %26 : vector<16x128xf32>
    %c1_44 = arith.constant 1 : index
    %c0_45 = arith.constant 0 : index
    %c0_46 = arith.constant 0 : index
    %74 = vector.load %arg3[%c1_44, %c0_45, %c0_46] : memref<2x128x128xbf16, #tpu.memory_space<vmem>>, vector<1x128x128xbf16>
    %75 = vector.shape_cast %74 : vector<1x128x128xbf16> to vector<128x128xbf16>
    %76 = arith.truncf %73 : vector<16x128xf32> to vector<16x128xbf16>
    %cst_47 = arith.constant dense<0.000000e+00> : vector<16x128xf32>
    %77 = tpu.matmul %76, %75, %cst_47 {dimension_numbers = #tpu.dot_dimension_numbers<[1], [0], [0], [1], [0, 0, 1, 1], [], []>} : vector<16x128xbf16>, vector<128x128xbf16>, vector<16x128xf32> -> vector<16x128xf32>
    %c3 = arith.constant 3 : index
    %c0_48 = arith.constant 0 : index
    %78 = vector.load %arg6[%c3, %c0_48] : memref<8x128xf32, #tpu.memory_space<vmem>>, vector<1x128xf32>
    %79 = vector.broadcast %78 : vector<1x128xf32> to vector<16x128xf32>
    %80 = arith.addf %77, %79 : vector<16x128xf32>
    %cst_49 = arith.constant 0.000000e+00 : f32
    %81 = vector.broadcast %cst_49 : f32 to vector<16x128xf32>
    %82 = arith.maximumf %80, %81 : vector<16x128xf32>
    %83 = arith.addf %73, %82 : vector<16x128xf32>
    %c1_i32_50 = arith.constant 1 : i32
    %84 = tpu.dynamic_rotate %83 by %c1_i32_50 dim 0 : vector<16x128xf32>, i32 -> vector<16x128xf32>
    %cst_51 = arith.constant 0.000000e+00 : f32
    %85 = vector.broadcast %cst_51 : f32 to vector<16x128xf32>
    %86 = arith.select %3, %85, %84 : vector<16x128xi1>, vector<16x128xf32>
    %c3_52 = arith.constant 3 : index
    %c0_53 = arith.constant 0 : index
    %c0_54 = arith.constant 0 : index
    %87 = vector.load %arg4[%c3_52, %c0_53, %c0_54] : memref<6x128x128xbf16, #tpu.memory_space<vmem>>, vector<1x128x128xbf16>
    %88 = vector.shape_cast %87 : vector<1x128x128xbf16> to vector<128x128xbf16>
    %89 = arith.truncf %86 : vector<16x128xf32> to vector<16x128xbf16>
    %cst_55 = arith.constant dense<0.000000e+00> : vector<16x128xf32>
    %90 = tpu.matmul %89, %88, %cst_55 {dimension_numbers = #tpu.dot_dimension_numbers<[1], [0], [0], [1], [0, 0, 1, 1], [], []>} : vector<16x128xbf16>, vector<128x128xbf16>, vector<16x128xf32> -> vector<16x128xf32>
    %c4 = arith.constant 4 : index
    %c0_56 = arith.constant 0 : index
    %c0_57 = arith.constant 0 : index
    %91 = vector.load %arg4[%c4, %c0_56, %c0_57] : memref<6x128x128xbf16, #tpu.memory_space<vmem>>, vector<1x128x128xbf16>
    %92 = vector.shape_cast %91 : vector<1x128x128xbf16> to vector<128x128xbf16>
    %93 = arith.truncf %83 : vector<16x128xf32> to vector<16x128xbf16>
    %cst_58 = arith.constant dense<0.000000e+00> : vector<16x128xf32>
    %94 = tpu.matmul %93, %92, %cst_58 {dimension_numbers = #tpu.dot_dimension_numbers<[1], [0], [0], [1], [0, 0, 1, 1], [], []>} : vector<16x128xbf16>, vector<128x128xbf16>, vector<16x128xf32> -> vector<16x128xf32>
    %95 = arith.addf %90, %94 : vector<16x128xf32>
    %c15_i32_59 = arith.constant 15 : i32
    %96 = tpu.dynamic_rotate %83 by %c15_i32_59 dim 0 : vector<16x128xf32>, i32 -> vector<16x128xf32>
    %cst_60 = arith.constant 0.000000e+00 : f32
    %97 = vector.broadcast %cst_60 : f32 to vector<16x128xf32>
    %98 = arith.select %5, %97, %96 : vector<16x128xi1>, vector<16x128xf32>
    %c5 = arith.constant 5 : index
    %c0_61 = arith.constant 0 : index
    %c0_62 = arith.constant 0 : index
    %99 = vector.load %arg4[%c5, %c0_61, %c0_62] : memref<6x128x128xbf16, #tpu.memory_space<vmem>>, vector<1x128x128xbf16>
    %100 = vector.shape_cast %99 : vector<1x128x128xbf16> to vector<128x128xbf16>
    %101 = arith.truncf %98 : vector<16x128xf32> to vector<16x128xbf16>
    %cst_63 = arith.constant dense<0.000000e+00> : vector<16x128xf32>
    %102 = tpu.matmul %101, %100, %cst_63 {dimension_numbers = #tpu.dot_dimension_numbers<[1], [0], [0], [1], [0, 0, 1, 1], [], []>} : vector<16x128xbf16>, vector<128x128xbf16>, vector<16x128xf32> -> vector<16x128xf32>
    %103 = arith.addf %95, %102 : vector<16x128xf32>
    %c4_64 = arith.constant 4 : index
    %c0_65 = arith.constant 0 : index
    %104 = vector.load %arg6[%c4_64, %c0_65] : memref<8x128xf32, #tpu.memory_space<vmem>>, vector<1x128xf32>
    %105 = vector.broadcast %104 : vector<1x128xf32> to vector<16x128xf32>
    %106 = arith.addf %103, %105 : vector<16x128xf32>
    %cst_66 = arith.constant 0.000000e+00 : f32
    %107 = vector.broadcast %cst_66 : f32 to vector<16x128xf32>
    %108 = arith.maximumf %106, %107 : vector<16x128xf32>
    %109 = arith.truncf %26 : vector<16x128xf32> to vector<16x128xbf16>
    %110 = arith.truncf %82 : vector<16x128xf32> to vector<16x128xbf16>
    %111 = arith.truncf %108 : vector<16x128xf32> to vector<16x128xbf16>
    %112 = tpu.concatenate %109, %110, %111 in 1 : vector<16x128xbf16>, vector<16x128xbf16>, vector<16x128xbf16> -> vector<16x384xbf16>
    %c1_67 = arith.constant 1 : index
    %c0_68 = arith.constant 0 : index
    %c0_69 = arith.constant 0 : index
    %113 = vector.load %arg5[%c1_67, %c0_68, %c0_69] : memref<2x384x128xbf16, #tpu.memory_space<vmem>>, vector<1x384x128xbf16>
    %114 = vector.shape_cast %113 : vector<1x384x128xbf16> to vector<384x128xbf16>
    %cst_70 = arith.constant dense<0.000000e+00> : vector<16x128xf32>
    %115 = tpu.matmul %112, %114, %cst_70 {dimension_numbers = #tpu.dot_dimension_numbers<[1], [0], [0], [1], [0, 0, 1, 1], [], []>} : vector<16x384xbf16>, vector<384x128xbf16>, vector<16x128xf32> -> vector<16x128xf32>
    %c5_71 = arith.constant 5 : index
    %c0_72 = arith.constant 0 : index
    %116 = vector.load %arg6[%c5_71, %c0_72] : memref<8x128xf32, #tpu.memory_space<vmem>>, vector<1x128xf32>
    %117 = vector.broadcast %116 : vector<1x128xf32> to vector<16x128xf32>
    %118 = arith.addf %115, %117 : vector<16x128xf32>
    %119 = arith.addf %72, %118 : vector<16x128xf32>
    %c6 = arith.constant 6 : index
    %c0_73 = arith.constant 0 : index
    %120 = vector.load %arg6[%c6, %c0_73] : memref<8x128xf32, #tpu.memory_space<vmem>>, vector<1x128xf32>
    %121 = vector.broadcast %120 : vector<1x128xf32> to vector<16x128xf32>
    %122 = arith.mulf %0, %121 : vector<16x128xf32>
    %123 = arith.addf %119, %122 : vector<16x128xf32>
    %c7 = arith.constant 7 : index
    %c0_74 = arith.constant 0 : index
    %124 = vector.load %arg6[%c7, %c0_74] : memref<8x128xf32, #tpu.memory_space<vmem>>, vector<1x128xf32>
    %125 = vector.broadcast %124 : vector<1x128xf32> to vector<16x128xf32>
    %126 = arith.addf %123, %125 : vector<16x128xf32>
    %cst_75 = arith.constant 0.000000e+00 : f32
    %127 = vector.broadcast %cst_75 : f32 to vector<16x128xf32>
    %128 = arith.maximumf %126, %127 : vector<16x128xf32>
    %c0_76 = arith.constant 0 : index
    %c0_77 = arith.constant 0 : index
    %129 = vector.load %arg7[%c0_76, %c0_77] : memref<16x128xf32, #tpu.memory_space<vmem>>, vector<16x128xf32>
    tpu.vector_store %arg7[%c0_76, %c0_77], %128 {strides = array<i32>} : memref<16x128xf32, #tpu.memory_space<vmem>>, vector<16x128xf32>,
    return
  }
}

</mosaic_0001>

<llo_original>
// kernel: rep_cross_block.1
$region0: #{rep_cross_block.1}
  #allocation0 [shape = 'u32[]', space=smem, size = 0x4, offset = 0x4, fixed_abs, tag = 'smem constant byte address 0x4 - core index']
  #allocation1 [shape = 'u32[144,128]{1,0:T(1,128)}', space=vmem, size = 0x12000, scoped, tag = 'internal scratch']
  %s0 = inlined_call_operand.vmem [shape: f32[16,128], index: 0, kind: input, shape index: {}]
  %s1 = inlined_call_operand.hbm [shape: bf16[128,256], index: 1, kind: input, shape index: {}]
  %s2 = inlined_call_operand.hbm [shape: bf16[2,128,128], index: 2, kind: input, shape index: {}]
  %s3 = inlined_call_operand.hbm [shape: bf16[2,128,128], index: 3, kind: input, shape index: {}]
  %s4 = inlined_call_operand.vmem [shape: bf16[6,128,128], index: 4, kind: input, shape index: {}]
  %s5 = inlined_call_operand.hbm [shape: bf16[2,384,128], index: 5, kind: input, shape index: {}]
  %s6 = inlined_call_operand.vmem [shape: f32[8,128], index: 6, kind: input, shape index: {}]
  %s7 = inlined_call_operand.vmem [shape: f32[16,128], index: 7, kind: output, shape index: {}]
  %s8 = sld [smem:[#allocation0]]
  $region54: #{rep_cross_block.1} parent=0
    _
  %s10 = ssub.s32 1, %s8
  %s11 = scalar_select 0, %s10, %s8
  $region1: #{rep_cross_block.1} parent=0
    #allocation2 [shape = 'u8[65536]{0}', space=vmem, size = 0x10000, scoped, tag = 'input window, operand 1, single buffered']
    #allocation3 [shape = 's32[1]{0}', space=sflag, size = 0x4, scoped, tag = 'scoped memory for rep_cross_block.1']
    #allocation4 [shape = 'u8[65536]{0}', space=vmem, size = 0x10000, scoped, tag = 'input window, operand 2, single buffered']
    #allocation5 [shape = 's32[1]{0}', space=sflag, size = 0x4, scoped, tag = 'scoped memory for rep_cross_block.1']
    #allocation6 [shape = 'u8[65536]{0}', space=vmem, size = 0x10000, scoped, tag = 'input window, operand 3, single buffered']
    #allocation7 [shape = 'u8[196608]{0}', space=vmem, size = 0x30000, scoped, tag = 'input window, operand 5, single buffered']
    #allocation8 [shape = 's32[1]{0}', space=sflag, size = 0x4, scoped, tag = 'scoped memory for rep_cross_block.1']
    %12 = vsyncpa [#allocation3], 0
    %13 = vsyncpa [#allocation5], 0
    %14 = vsyncpa [#allocation8], 0
    // Predicated region
    $region2: #{rep_cross_block.1} parent=1 // pred_check
      _
    $region3: #{rep_cross_block.1} parent=1 // pred_check_branch
      %16 = sbr.rel (0) target = $region5
    $region4: #{rep_cross_block.1} parent=1 // pred_region
      _
    $region5: #{rep_cross_block.1} parent=1 // pred_fallthru
      _
    // Predicated region
    $region6: #{rep_cross_block.1} parent=1 // pred_check
      _
    $region7: #{rep_cross_block.1} parent=1 // pred_check_branch
      %18 = sbr.rel (0) target = $region9
    $region8: #{rep_cross_block.1} parent=1 // pred_region
      %s20 = ssub.s32 2048, 2048
      %21 = vsyncadd [#allocation3], %s20
      %s22 = sshll.u32 [#allocation2], 4
      %s23 = int_to_ptr.vmem [resolvable:$true] %s22
      %28 = dma.hbm_to_vmem [thread:$0]  %s1, 2048, %s23, [#allocation3], 128, 128, 8
    $region9: #{rep_cross_block.1} parent=1 // pred_fallthru
      _
    // Predicated region
    $region10: #{rep_cross_block.1} parent=1 // pred_check
      _
    $region11: #{rep_cross_block.1} parent=1 // pred_check_branch
      %30 = sbr.rel (0) target = $region13
    $region12: #{rep_cross_block.1} parent=1 // pred_region
      %s32 = ssub.s32 2048, 2048
      %33 = vsyncadd [#allocation5], %s32
      %s34 = sshll.u32 [#allocation4], 4
      %s35 = int_to_ptr.vmem [resolvable:$true] %s34
      %40 = dma.hbm_to_vmem [thread:$0]  %s2, 2048, %s35, [#allocation5], 64, 64, 4
    $region13: #{rep_cross_block.1} parent=1 // pred_fallthru
      _
    // Predicated region
    $region14: #{rep_cross_block.1} parent=1 // pred_check
      _
    $region15: #{rep_cross_block.1} parent=1 // pred_check_branch
      %42 = sbr.rel (0) target = $region17
    $region16: #{rep_cross_block.1} parent=1 // pred_region
      %s44 = ssub.s32 2048, 2048
      %45 = vsyncadd [#allocation5], %s44
      %s46 = sshll.u32 [#allocation6], 4
      %s47 = int_to_ptr.vmem [resolvable:$true] %s46
      %52 = dma.hbm_to_vmem [thread:$0]  %s3, 2048, %s47, [#allocation5], 64, 64, 4
    $region17: #{rep_cross_block.1} parent=1 // pred_fallthru
      _
    // Predicated region
    $region18: #{rep_cross_block.1} parent=1 // pred_check
      _
    $region19: #{rep_cross_block.1} parent=1 // pred_check_branch
      %54 = sbr.rel (0) target = $region21
    $region20: #{rep_cross_block.1} parent=1 // pred_region
      _
    $region21: #{rep_cross_block.1} parent=1 // pred_fallthru
      _
    // Predicated region
    $region22: #{rep_cross_block.1} parent=1 // pred_check
      _
    $region23: #{rep_cross_block.1} parent=1 // pred_check_branch
      %56 = sbr.rel (0) target = $region25
    $region24: #{rep_cross_block.1} parent=1 // pred_region
      %s58 = ssub.s32 6144, 6144
      %59 = vsyncadd [#allocation8], %s58
      %s60 = sshll.u32 [#allocation7], 4
      %s61 = int_to_ptr.vmem [resolvable:$true] %s60
      %66 = dma.hbm_to_vmem [thread:$0]  %s5, 6144, %s61, [#allocation8], 64, 64, 4
    $region25: #{rep_cross_block.1} parent=1 // pred_fallthru
      _
    // Predicated region
    $region26: #{rep_cross_block.1} parent=1 // pred_check
      _
    $region27: #{rep_cross_block.1} parent=1 // pred_check_branch
      %68 = sbr.rel (0) target = $region29
    $region28: #{rep_cross_block.1} parent=1 // pred_region
      _
    $region29: #{rep_cross_block.1} parent=1 // pred_fallthru
      _
    // Predicated region
    $region30: #{rep_cross_block.1} parent=1 // pred_check
      _
    $region31: #{rep_cross_block.1} parent=1 // pred_check_branch
      %70 = sbr.rel (0) target = $region33
    $region32: #{rep_cross_block.1} parent=1 // pred_region
      %71 = dma.done [#allocation3], 2048
    $region33: #{rep_cross_block.1} parent=1 // pred_fallthru
      _
    // Predicated region
    $region34: #{rep_cross_block.1} parent=1 // pred_check
      _
    $region35: #{rep_cross_block.1} parent=1 // pred_check_branch
      %73 = sbr.rel (0) target = $region37
    $region36: #{rep_cross_block.1} parent=1 // pred_region
      %74 = dma.done [#allocation5], 2048
    $region37: #{rep_cross_block.1} parent=1 // pred_fallthru
      _
    // Predicated region
    $region38: #{rep_cross_block.1} parent=1 // pred_check
      _
    $region39: #{rep_cross_block.1} parent=1 // pred_check_branch
      %76 = sbr.rel (0) target = $region41
    $region40: #{rep_cross_block.1} parent=1 // pred_region
      %77 = dma.done [#allocation5], 2048
    $region41: #{rep_cross_block.1} parent=1 // pred_fallthru
      _
    // Predicated region
    $region42: #{rep_cross_block.1} parent=1 // pred_check
      _
    $region43: #{rep_cross_block.1} parent=1 // pred_check_branch
      %79 = sbr.rel (0) target = $region45
    $region44: #{rep_cross_block.1} parent=1 // pred_region
      %80 = dma.done [#allocation8], 6144
    $region45: #{rep_cross_block.1} parent=1 // pred_fallthru
      _
    %v82 = vld [vmem:[%s0] sm:$0xff]
    %v83 = vld [vmem:[%s0 + $0x8] sm:$0xff]
    %v84 = vlaneseq
    %v85 = vshrl.u32 %v84, 7
    %v86 = vadd.s32 %v85, 8
    %vm87 = vcmp.eq.s32.totalorder %v85, 0
    %vm88 = vcmp.eq.s32.totalorder %v86, 0
    %vm89 = vcmp.eq.s32.totalorder %v85, 15
    %vm90 = vcmp.eq.s32.totalorder %v86, 15
    %v91 = vld [vmem:[#allocation2] sm:$0xff]
    %v92 = vld [vmem:[#allocation2 + $0x8] sm:$0xff]
    %v93 = vld [vmem:[#allocation2 + $0x10] sm:$0xff]
    %v94 = vld [vmem:[#allocation2 + $0x18] sm:$0xff]
    %v95 = vld [vmem:[#allocation2 + $0x20] sm:$0xff]
    %v96 = vld [vmem:[#allocation2 + $0x28] sm:$0xff]
    %v97 = vld [vmem:[#allocation2 + $0x30] sm:$0xff]
    %v98 = vld [vmem:[#allocation2 + $0x38] sm:$0xff]
    %v99 = vld [vmem:[#allocation2 + $0x40] sm:$0xff]
    %v100 = vld [vmem:[#allocation2 + $0x48] sm:$0xff]
    %v101 = vld [vmem:[#allocation2 + $0x50] sm:$0xff]
    %v102 = vld [vmem:[#allocation2 + $0x58] sm:$0xff]
    %v103 = vld [vmem:[#allocation2 + $0x60] sm:$0xff]
    %v104 = vld [vmem:[#allocation2 + $0x68] sm:$0xff]
    %v105 = vld [vmem:[#allocation2 + $0x70] sm:$0xff]
    %v106 = vld [vmem:[#allocation2 + $0x78] sm:$0xff]
    %v107 = vpack.c.bf16 %v83, %v82
    %v124 = vunpack.c.l.b16 %v91
    %v125 = vunpack.c.h.b16 %v91
    %v126 = vunpack.c.l.b16 %v92
    %v127 = vunpack.c.h.b16 %v92
    %v128 = vunpack.c.l.b16 %v93
    %v129 = vunpack.c.h.b16 %v93
    %v130 = vunpack.c.l.b16 %v94
    %v131 = vunpack.c.h.b16 %v94
    %v132 = vunpack.c.l.b16 %v95
    %v133 = vunpack.c.h.b16 %v95
    %v134 = vunpack.c.l.b16 %v96
    %v135 = vunpack.c.h.b16 %v96
    %v136 = vunpack.c.l.b16 %v97
    %v137 = vunpack.c.h.b16 %v97
    %v138 = vunpack.c.l.b16 %v98
    %v139 = vunpack.c.h.b16 %v98
    %v140 = vunpack.c.l.b16 %v99
    %v141 = vunpack.c.h.b16 %v99
    %v142 = vunpack.c.l.b16 %v100
    %v143 = vunpack.c.h.b16 %v100
    %v144 = vunpack.c.l.b16 %v101
    %v145 = vunpack.c.h.b16 %v101
    %v146 = vunpack.c.l.b16 %v102
    %v147 = vunpack.c.h.b16 %v102
    %v148 = vunpack.c.l.b16 %v103
    %v149 = vunpack.c.h.b16 %v103
    %v150 = vunpack.c.l.b16 %v104
    %v151 = vunpack.c.h.b16 %v104
    %v152 = vunpack.c.l.b16 %v105
    %v153 = vunpack.c.h.b16 %v105
    %v154 = vunpack.c.l.b16 %v106
    %v155 = vunpack.c.h.b16 %v106
    %v156 = vpack.c.b16 %v126, %v124
    %v157 = vpack.c.b16 %v127, %v125
    %v158 = vpack.c.b16 %v130, %v128
    %v159 = vpack.c.b16 %v131, %v129
    %v160 = vpack.c.b16 %v134, %v132
    %v161 = vpack.c.b16 %v135, %v133
    %v162 = vpack.c.b16 %v138, %v136
    %v163 = vpack.c.b16 %v139, %v137
    %v164 = vpack.c.b16 %v142, %v140
    %v165 = vpack.c.b16 %v143, %v141
    %v166 = vpack.c.b16 %v146, %v144
    %v167 = vpack.c.b16 %v147, %v145
    %v168 = vpack.c.b16 %v150, %v148
    %v169 = vpack.c.b16 %v151, %v149
    %v170 = vpack.c.b16 %v154, %v152
    %v171 = vpack.c.b16 %v155, %v153
    %188 = vmatprep.subr.bf16.mxu0 %v157
    %189 = vmatpush1.bf16.msra.mxu0 %v156
    %190 = vmatprep.subr.bf16.mxu0 %v159
    %191 = vmatpush1.bf16.msra.mxu0 %v158
    %192 = vmatprep.subr.bf16.mxu0 %v161
    %193 = vmatpush1.bf16.msra.mxu0 %v160
    %194 = vmatprep.subr.bf16.mxu0 %v163
    %195 = vmatpush1.bf16.msra.mxu0 %v162
    %196 = vmatprep.subr.bf16.mxu0 %v165
    %197 = vmatpush1.bf16.msra.mxu0 %v164
    %198 = vmatprep.subr.bf16.mxu0 %v167
    %199 = vmatpush1.bf16.msra.mxu0 %v166
    %200 = vmatprep.subr.bf16.mxu0 %v169
    %201 = vmatpush1.bf16.msra.mxu0 %v168
    %202 = vmatprep.subr.bf16.mxu0 %v171
    %203 = vmatpush1.bf16.msra.mxu0 %v170
    %204 = vmatprep.subr.bf16.mxu0 0
    %205 = vmatpush1.bf16.msra.mxu0 0
    %206 = vmatprep.subr.bf16.mxu0 0
    %207 = vmatpush1.bf16.msra.mxu0 0
    %208 = vmatprep.subr.bf16.mxu0 0
    %209 = vmatpush1.bf16.msra.mxu0 0
    %210 = vmatprep.subr.bf16.mxu0 0
    %211 = vmatpush1.bf16.msra.mxu0 0
    %212 = vmatprep.subr.bf16.mxu0 0
    %213 = vmatpush1.bf16.msra.mxu0 0
    %214 = vmatprep.subr.bf16.mxu0 0
    %215 = vmatpush1.bf16.msra.mxu0 0
    %216 = vmatprep.subr.bf16.mxu0 0
    %217 = vmatpush1.bf16.msra.mxu0 0
    %218 = vmatprep.subr.bf16.mxu0 0
    %219 = vmatpush1.bf16.msra.mxu0 0
    %220 = vmatprep.mubr.bf16.mxu0 0
    %221 = vmatmul.mubr.bf16.gmra.mrb[0].mxu0 %v107
    %v222 = vpop.f32.mrb[0].mxu0
    %v223 = vadd.f32 0.0, %v222
    %v224 = vpop.f32.mrb[0].mxu0
    %v225 = vadd.f32 0.0, %v224
    %v226 = vpop.f32.mrb[0].mxu0
    %v227 = vadd.f32 0.0, %v226
    %v228 = vpop.f32.mrb[0].mxu0
    %v229 = vadd.f32 0.0, %v228
    %230 = vdwg.mxu0
    %v231 = vrot.slane %v82, 7
    %v232 = vrot.slane %v83, 7
    %vm233 = vcmp.lt.s32.totalorder %v85, 1
    %v234 = vsel %vm233, %v231, %v232
    %v235 = vsel %vm233, %v232, %v231
    %v236 = vsel %vm87, 0.0, %v235
    %v237 = vsel %vm88, 0.0, %v234
    %v238 = vld [vmem:[#allocation4] sm:$0xf]
    %v239 = vld [vmem:[#allocation4 + $0x4] sm:$0xf]
    %v240 = vld [vmem:[#allocation4 + $0x8] sm:$0xf]
    %v241 = vld [vmem:[#allocation4 + $0xc] sm:$0xf]
    %v242 = vld [vmem:[#allocation4 + $0x10] sm:$0xf]
    %v243 = vld [vmem:[#allocation4 + $0x14] sm:$0xf]
    %v244 = vld [vmem:[#allocation4 + $0x18] sm:$0xf]
    %v245 = vld [vmem:[#allocation4 + $0x1c] sm:$0xf]
    %v246 = vld [vmem:[#allocation4 + $0x20] sm:$0xf]
    %v247 = vld [vmem:[#allocation4 + $0x24] sm:$0xf]
    %v248 = vld [vmem:[#allocation4 + $0x28] sm:$0xf]
    %v249 = vld [vmem:[#allocation4 + $0x2c] sm:$0xf]
    %v250 = vld [vmem:[#allocation4 + $0x30] sm:$0xf]
    %v251 = vld [vmem:[#allocation4 + $0x34] sm:$0xf]
    %v252 = vld [vmem:[#allocation4 + $0x38] sm:$0xf]
    %v253 = vld [vmem:[#allocation4 + $0x3c] sm:$0xf]
    %v254 = vpack.c.bf16 %v237, %v236
    %v271 = vunpack.c.l.b16 %v238
    %v272 = vunpack.c.l.b16 %v239
    %v273 = vunpack.c.l.b16 %v240
    %v274 = vunpack.c.l.b16 %v241
    %v275 = vunpack.c.l.b16 %v242
    %v276 = vunpack.c.l.b16 %v243
    %v277 = vunpack.c.l.b16 %v244
    %v278 = vunpack.c.l.b16 %v245
    %v279 = vunpack.c.l.b16 %v246
    %v280 = vunpack.c.l.b16 %v247
    %v281 = vunpack.c.l.b16 %v248
    %v282 = vunpack.c.l.b16 %v249
    %v283 = vunpack.c.l.b16 %v250
    %v284 = vunpack.c.l.b16 %v251
    %v285 = vunpack.c.l.b16 %v252
    %v286 = vunpack.c.l.b16 %v253
    %v287 = vpack.c.b16 %v272, %v271
    %v288 = vpack.c.b16 %v274, %v273
    %v289 = vpack.c.b16 %v276, %v275
    %v290 = vpack.c.b16 %v278, %v277
    %v291 = vpack.c.b16 %v280, %v279
    %v292 = vpack.c.b16 %v282, %v281
    %v293 = vpack.c.b16 %v284, %v283
    %v294 = vpack.c.b16 %v286, %v285
    %303 = vmatprep.subr.bf16.mxu0 0
    %304 = vmatpush1.bf16.msra.mxu0 %v287
    %305 = vmatprep.subr.bf16.mxu0 0
    %306 = vmatpush1.bf16.msra.mxu0 %v288
    %307 = vmatprep.subr.bf16.mxu0 0
    %308 = vmatpush1.bf16.msra.mxu0 %v289
    %309 = vmatprep.subr.bf16.mxu0 0
    %310 = vmatpush1.bf16.msra.mxu0 %v290
    %311 = vmatprep.subr.bf16.mxu0 0
    %312 = vmatpush1.bf16.msra.mxu0 %v291
    %313 = vmatprep.subr.bf16.mxu0 0
    %314 = vmatpush1.bf16.msra.mxu0 %v292
    %315 = vmatprep.subr.bf16.mxu0 0
    %316 = vmatpush1.bf16.msra.mxu0 %v293
    %317 = vmatprep.subr.bf16.mxu0 0
    %318 = vmatpush1.bf16.msra.mxu0 %v294
    %319 = vmatprep.subr.bf16.mxu0 0
    %320 = vmatpush1.bf16.msra.mxu0 0
    %321 = vmatprep.subr.bf16.mxu0 0
    %322 = vmatpush1.bf16.msra.mxu0 0
    %323 = vmatprep.subr.bf16.mxu0 0
    %324 = vmatpush1.bf16.msra.mxu0 0
    %325 = vmatprep.subr.bf16.mxu0 0
    %326 = vmatpush1.bf16.msra.mxu0 0
    %327 = vmatprep.subr.bf16.mxu0 0
    %328 = vmatpush1.bf16.msra.mxu0 0
    %329 = vmatprep.subr.bf16.mxu0 0
    %330 = vmatpush1.bf16.msra.mxu0 0
    %331 = vmatprep.subr.bf16.mxu0 0
    %332 = vmatpush1.bf16.msra.mxu0 0
    %333 = vmatprep.subr.bf16.mxu0 0
    %334 = vmatpush1.bf16.msra.mxu0 0
    %335 = vmatprep.mubr.bf16.mxu0 0
    %336 = vmatmul.mubr.bf16.gmra.mrb[0].mxu0 %v254
    %v337 = vpop.f32.mrb[0].mxu0
    %v338 = vadd.f32 0.0, %v337
    %v339 = vpop.f32.mrb[0].mxu0
    %v340 = vpop.f32.mrb[0].mxu0
    %v341 = vadd.f32 0.0, %v340
    %v342 = vpop.f32.mrb[0].mxu0
    %343 = vdwg.mxu0
    %v344 = vadd.f32 %v223, %v338
    %v345 = vadd.f32 %v227, %v341
    %v346 = vrot.slane %v82, 1
    %v347 = vrot.slane %v83, 1
    %vm348 = vcmp.lt.s32.totalorder %v85, 7
    %v349 = vsel %vm348, %v346, %v347
    %v350 = vsel %vm348, %v347, %v346
    %v351 = vsel %vm89, 0.0, %v349
    %v352 = vsel %vm90, 0.0, %v350
    %s353 = scalar_lea.vmem [#allocation4], 64
    %v354 = vld [vmem:[%s353] sm:$0xf]
    %v355 = vld [vmem:[%s353 + $0x4] sm:$0xf]
    %v356 = vld [vmem:[%s353 + $0x8] sm:$0xf]
    %v357 = vld [vmem:[%s353 + $0xc] sm:$0xf]
    %v358 = vld [vmem:[%s353 + $0x10] sm:$0xf]
    %v359 = vld [vmem:[%s353 + $0x14] sm:$0xf]
    %v360 = vld [vmem:[%s353 + $0x18] sm:$0xf]
    %v361 = vld [vmem:[%s353 + $0x1c] sm:$0xf]
    %v362 = vld [vmem:[%s353 + $0x20] sm:$0xf]
    %v363 = vld [vmem:[%s353 + $0x24] sm:$0xf]
    %v364 = vld [vmem:[%s353 + $0x28] sm:$0xf]
    %v365 = vld [vmem:[%s353 + $0x2c] sm:$0xf]
    %v366 = vld [vmem:[%s353 + $0x30] sm:$0xf]
    %v367 = vld [vmem:[%s353 + $0x34] sm:$0xf]
    %v368 = vld [vmem:[%s353 + $0x38] sm:$0xf]
    %v369 = vld [vmem:[%s353 + $0x3c] sm:$0xf]
    %v370 = vpack.c.bf16 %v352, %v351
    %v387 = vunpack.c.l.b16 %v354
    %v388 = vunpack.c.l.b16 %v355
    %v389 = vunpack.c.l.b16 %v356
    %v390 = vunpack.c.l.b16 %v357
    %v391 = vunpack.c.l.b16 %v358
    %v392 = vunpack.c.l.b16 %v359
    %v393 = vunpack.c.l.b16 %v360
    %v394 = vunpack.c.l.b16 %v361
    %v395 = vunpack.c.l.b16 %v362
    %v396 = vunpack.c.l.b16 %v363
    %v397 = vunpack.c.l.b16 %v364
    %v398 = vunpack.c.l.b16 %v365
    %v399 = vunpack.c.l.b16 %v366
    %v400 = vunpack.c.l.b16 %v367
    %v401 = vunpack.c.l.b16 %v368
    %v402 = vunpack.c.l.b16 %v369
    %v403 = vpack.c.b16 %v388, %v387
    %v404 = vpack.c.b16 %v390, %v389
    %v405 = vpack.c.b16 %v392, %v391
    %v406 = vpack.c.b16 %v394, %v393
    %v407 = vpack.c.b16 %v396, %v395
    %v408 = vpack.c.b16 %v398, %v397
    %v409 = vpack.c.b16 %v400, %v399
    %v410 = vpack.c.b16 %v402, %v401
    %419 = vmatprep.subr.bf16.mxu0 0
    %420 = vmatpush1.bf16.msra.mxu0 %v403
    %421 = vmatprep.subr.bf16.mxu0 0
    %422 = vmatpush1.bf16.msra.mxu0 %v404
    %423 = vmatprep.subr.bf16.mxu0 0
    %424 = vmatpush1.bf16.msra.mxu0 %v405
    %425 = vmatprep.subr.bf16.mxu0 0
    %426 = vmatpush1.bf16.msra.mxu0 %v406
    %427 = vmatprep.subr.bf16.mxu0 0
    %428 = vmatpush1.bf16.msra.mxu0 %v407
    %429 = vmatprep.subr.bf16.mxu0 0
    %430 = vmatpush1.bf16.msra.mxu0 %v408
    %431 = vmatprep.subr.bf16.mxu0 0
    %432 = vmatpush1.bf16.msra.mxu0 %v409
    %433 = vmatprep.subr.bf16.mxu0 0
    %434 = vmatpush1.bf16.msra.mxu0 %v410
    %435 = vmatprep.subr.bf16.mxu0 0
    %436 = vmatpush1.bf16.msra.mxu0 0
    %437 = vmatprep.subr.bf16.mxu0 0
    %438 = vmatpush1.bf16.msra.mxu0 0
    %439 = vmatprep.subr.bf16.mxu0 0
    %440 = vmatpush1.bf16.msra.mxu0 0
    %441 = vmatprep.subr.bf16.mxu0 0
    %442 = vmatpush1.bf16.msra.mxu0 0
    %443 = vmatprep.subr.bf16.mxu0 0
    %444 = vmatpush1.bf16.msra.mxu0 0
    %445 = vmatprep.subr.bf16.mxu0 0
    %446 = vmatpush1.bf16.msra.mxu0 0
    %447 = vmatprep.subr.bf16.mxu0 0
    %448 = vmatpush1.bf16.msra.mxu0 0
    %449 = vmatprep.subr.bf16.mxu0 0
    %450 = vmatpush1.bf16.msra.mxu0 0
    %451 = vmatprep.mubr.bf16.mxu0 0
    %452 = vmatmul.mubr.bf16.gmra.mrb[0].mxu0 %v370
    %v453 = vpop.f32.mrb[0].mxu0
    %v454 = vadd.f32 0.0, %v453
    %v455 = vpop.f32.mrb[0].mxu0
    %v456 = vpop.f32.mrb[0].mxu0
    %v457 = vadd.f32 0.0, %v456
    %v458 = vpop.f32.mrb[0].mxu0
    %459 = vdwg.mxu0
    %v460 = vadd.f32 %v344, %v454
    %v461 = vadd.f32 %v345, %v457
    %v462 = vadd.f32 %v460, %v460
    %v463 = vadd.f32 %v461, %v461
    %v464 = vld [vmem:[#allocation6] sm:$0xf]
    %v465 = vld [vmem:[#allocation6 + $0x4] sm:$0xf]
    %v466 = vld [vmem:[#allocation6 + $0x8] sm:$0xf]
    %v467 = vld [vmem:[#allocation6 + $0xc] sm:$0xf]
    %v468 = vld [vmem:[#allocation6 + $0x10] sm:$0xf]
    %v469 = vld [vmem:[#allocation6 + $0x14] sm:$0xf]
    %v470 = vld [vmem:[#allocation6 + $0x18] sm:$0xf]
    %v471 = vld [vmem:[#allocation6 + $0x1c] sm:$0xf]
    %v472 = vld [vmem:[#allocation6 + $0x20] sm:$0xf]
    %v473 = vld [vmem:[#allocation6 + $0x24] sm:$0xf]
    %v474 = vld [vmem:[#allocation6 + $0x28] sm:$0xf]
    %v475 = vld [vmem:[#allocation6 + $0x2c] sm:$0xf]
    %v476 = vld [vmem:[#allocation6 + $0x30] sm:$0xf]
    %v477 = vld [vmem:[#allocation6 + $0x34] sm:$0xf]
    %v478 = vld [vmem:[#allocation6 + $0x38] sm:$0xf]
    %v479 = vld [vmem:[#allocation6 + $0x3c] sm:$0xf]
    %v480 = vpack.c.bf16 %v463, %v462
    %v481 = vld [vmem:[%s6] sm:$0x1]
    %v482 = vlaneseq
    %v483 = vshrl.u32 %v482, 7
    %v484 = vsub.s32 0, %v483
    %v485 = vrot.slane %v481, %v484
    %v502 = vunpack.c.l.b16 %v464
    %v503 = vunpack.c.l.b16 %v465
    %v504 = vunpack.c.l.b16 %v466
    %v505 = vunpack.c.l.b16 %v467
    %v506 = vunpack.c.l.b16 %v468
    %v507 = vunpack.c.l.b16 %v469
    %v508 = vunpack.c.l.b16 %v470
    %v509 = vunpack.c.l.b16 %v471
    %v510 = vunpack.c.l.b16 %v472
    %v511 = vunpack.c.l.b16 %v473
    %v512 = vunpack.c.l.b16 %v474
    %v513 = vunpack.c.l.b16 %v475
    %v514 = vunpack.c.l.b16 %v476
    %v515 = vunpack.c.l.b16 %v477
    %v516 = vunpack.c.l.b16 %v478
    %v517 = vunpack.c.l.b16 %v479
    %v518 = vpack.c.b16 %v503, %v502
    %v519 = vpack.c.b16 %v505, %v504
    %v520 = vpack.c.b16 %v507, %v506
    %v521 = vpack.c.b16 %v509, %v508
    %v522 = vpack.c.b16 %v511, %v510
    %v523 = vpack.c.b16 %v513, %v512
    %v524 = vpack.c.b16 %v515, %v514
    %v525 = vpack.c.b16 %v517, %v516
    %534 = vmatprep.subr.bf16.mxu0 0
    %535 = vmatpush1.bf16.msra.mxu0 %v518
    %536 = vmatprep.subr.bf16.mxu0 0
    %537 = vmatpush1.bf16.msra.mxu0 %v519
    %538 = vmatprep.subr.bf16.mxu0 0
    %539 = vmatpush1.bf16.msra.mxu0 %v520
    %540 = vmatprep.subr.bf16.mxu0 0
    %541 = vmatpush1.bf16.msra.mxu0 %v521
    %542 = vmatprep.subr.bf16.mxu0 0
    %543 = vmatpush1.bf16.msra.mxu0 %v522
    %544 = vmatprep.subr.bf16.mxu0 0
    %545 = vmatpush1.bf16.msra.mxu0 %v523
    %546 = vmatprep.subr.bf16.mxu0 0
    %547 = vmatpush1.bf16.msra.mxu0 %v524
    %548 = vmatprep.subr.bf16.mxu0 0
    %549 = vmatpush1.bf16.msra.mxu0 %v525
    %550 = vmatprep.subr.bf16.mxu0 0
    %551 = vmatpush1.bf16.msra.mxu0 0
    %552 = vmatprep.subr.bf16.mxu0 0
    %553 = vmatpush1.bf16.msra.mxu0 0
    %554 = vmatprep.subr.bf16.mxu0 0
    %555 = vmatpush1.bf16.msra.mxu0 0
    %556 = vmatprep.subr.bf16.mxu0 0
    %557 = vmatpush1.bf16.msra.mxu0 0
    %558 = vmatprep.subr.bf16.mxu0 0
    %559 = vmatpush1.bf16.msra.mxu0 0
    %560 = vmatprep.subr.bf16.mxu0 0
    %561 = vmatpush1.bf16.msra.mxu0 0
    %562 = vmatprep.subr.bf16.mxu0 0
    %563 = vmatpush1.bf16.msra.mxu0 0
    %564 = vmatprep.subr.bf16.mxu0 0
    %565 = vmatpush1.bf16.msra.mxu0 0
    %566 = vmatprep.mubr.bf16.mxu0 0
    %567 = vmatmul.mubr.bf16.gmra.mrb[0].mxu0 %v480
    %v568 = vpop.f32.mrb[0].mxu0
    %v569 = vadd.f32 %v485, %v568
    %v570 = vpop.f32.mrb[0].mxu0
    %v571 = vpop.f32.mrb[0].mxu0
    %v572 = vadd.f32 %v485, %v571
    %v573 = vpop.f32.mrb[0].mxu0
    %574 = vdwg.mxu0
    %v575 = vmax.f32 %v569, 0.0
    %v576 = vmax.f32 %v572, 0.0
    %v577 = vadd.f32 %v462, %v575
    %v578 = vadd.f32 %v463, %v576
    %v579 = vrot.slane %v577, 7
    %v580 = vrot.slane %v578, 7
    %v581 = vsel %vm233, %v579, %v580
    %v582 = vsel %vm233, %v580, %v579
    %v583 = vsel %vm87, 0.0, %v582
    %v584 = vsel %vm88, 0.0, %v581
    %v585 = vld [vmem:[%s4] sm:$0xf]
    %v586 = vld [vmem:[%s4 + $0x4] sm:$0xf]
    %v587 = vld [vmem:[%s4 + $0x8] sm:$0xf]
    %v588 = vld [vmem:[%s4 + $0xc] sm:$0xf]
    %v589 = vld [vmem:[%s4 + $0x10] sm:$0xf]
    %v590 = vld [vmem:[%s4 + $0x14] sm:$0xf]
    %v591 = vld [vmem:[%s4 + $0x18] sm:$0xf]
    %v592 = vld [vmem:[%s4 + $0x1c] sm:$0xf]
    %v593 = vld [vmem:[%s4 + $0x20] sm:$0xf]
    %v594 = vld [vmem:[%s4 + $0x24] sm:$0xf]
    %v595 = vld [vmem:[%s4 + $0x28] sm:$0xf]
    %v596 = vld [vmem:[%s4 + $0x2c] sm:$0xf]
    %v597 = vld [vmem:[%s4 + $0x30] sm:$0xf]
    %v598 = vld [vmem:[%s4 + $0x34] sm:$0xf]
    %v599 = vld [vmem:[%s4 + $0x38] sm:$0xf]
    %v600 = vld [vmem:[%s4 + $0x3c] sm:$0xf]
    %v601 = vpack.c.bf16 %v584, %v583
    %s602 = scalar_lea.vmem %s4, 64
    %v603 = vld [vmem:[%s602] sm:$0xf]
    %v604 = vld [vmem:[%s602 + $0x4] sm:$0xf]
    %v605 = vld [vmem:[%s602 + $0x8] sm:$0xf]
    %v606 = vld [vmem:[%s602 + $0xc] sm:$0xf]
    %v607 = vld [vmem:[%s602 + $0x10] sm:$0xf]
    %v608 = vld [vmem:[%s602 + $0x14] sm:$0xf]
    %v609 = vld [vmem:[%s602 + $0x18] sm:$0xf]
    %v610 = vld [vmem:[%s602 + $0x1c] sm:$0xf]
    %v611 = vld [vmem:[%s602 + $0x20] sm:$0xf]
    %v612 = vld [vmem:[%s602 + $0x24] sm:$0xf]
    %v613 = vld [vmem:[%s602 + $0x28] sm:$0xf]
    %v614 = vld [vmem:[%s602 + $0x2c] sm:$0xf]
    %v615 = vld [vmem:[%s602 + $0x30] sm:$0xf]
    %v616 = vld [vmem:[%s602 + $0x34] sm:$0xf]
    %v617 = vld [vmem:[%s602 + $0x38] sm:$0xf]
    %v618 = vld [vmem:[%s602 + $0x3c] sm:$0xf]
    %v619 = vpack.c.bf16 %v578, %v577
    %v636 = vunpack.c.l.b16 %v603
    %v637 = vunpack.c.l.b16 %v604
    %v638 = vunpack.c.l.b16 %v605
    %v639 = vunpack.c.l.b16 %v606
    %v640 = vunpack.c.l.b16 %v607
    %v641 = vunpack.c.l.b16 %v608
    %v642 = vunpack.c.l.b16 %v609
    %v643 = vunpack.c.l.b16 %v610
    %v644 = vunpack.c.l.b16 %v611
    %v645 = vunpack.c.l.b16 %v612
    %v646 = vunpack.c.l.b16 %v613
    %v647 = vunpack.c.l.b16 %v614
    %v648 = vunpack.c.l.b16 %v615
    %v649 = vunpack.c.l.b16 %v616
    %v650 = vunpack.c.l.b16 %v617
    %v651 = vunpack.c.l.b16 %v618
    %v652 = vpack.c.b16 %v637, %v636
    %v653 = vpack.c.b16 %v639, %v638
    %v654 = vpack.c.b16 %v641, %v640
    %v655 = vpack.c.b16 %v643, %v642
    %v656 = vpack.c.b16 %v645, %v644
    %v657 = vpack.c.b16 %v647, %v646
    %v658 = vpack.c.b16 %v649, %v648
    %v659 = vpack.c.b16 %v651, %v650
    %668 = vmatprep.subr.bf16.mxu0 0
    %669 = vmatpush1.bf16.msra.mxu0 %v652
    %670 = vmatprep.subr.bf16.mxu0 0
    %671 = vmatpush1.bf16.msra.mxu0 %v653
    %672 = vmatprep.subr.bf16.mxu0 0
    %673 = vmatpush1.bf16.msra.mxu0 %v654
    %674 = vmatprep.subr.bf16.mxu0 0
    %675 = vmatpush1.bf16.msra.mxu0 %v655
    %676 = vmatprep.subr.bf16.mxu0 0
    %677 = vmatpush1.bf16.msra.mxu0 %v656
    %678 = vmatprep.subr.bf16.mxu0 0
    %679 = vmatpush1.bf16.msra.mxu0 %v657
    %680 = vmatprep.subr.bf16.mxu0 0
    %681 = vmatpush1.bf16.msra.mxu0 %v658
    %682 = vmatprep.subr.bf16.mxu0 0
    %683 = vmatpush1.bf16.msra.mxu0 %v659
    %684 = vmatprep.subr.bf16.mxu0 0
    %685 = vmatpush1.bf16.msra.mxu0 0
    %686 = vmatprep.subr.bf16.mxu0 0
    %687 = vmatpush1.bf16.msra.mxu0 0
    %688 = vmatprep.subr.bf16.mxu0 0
    %689 = vmatpush1.bf16.msra.mxu0 0
    %690 = vmatprep.subr.bf16.mxu0 0
    %691 = vmatpush1.bf16.msra.mxu0 0
    %692 = vmatprep.subr.bf16.mxu0 0
    %693 = vmatpush1.bf16.msra.mxu0 0
    %694 = vmatprep.subr.bf16.mxu0 0
    %695 = vmatpush1.bf16.msra.mxu0 0
    %696 = vmatprep.subr.bf16.mxu0 0
    %697 = vmatpush1.bf16.msra.mxu0 0
    %698 = vmatprep.subr.bf16.mxu0 0
    %699 = vmatpush1.bf16.msra.mxu0 0
    %700 = vmatprep.mubr.bf16.mxu0 0
    %701 = vmatmul.mubr.bf16.gmra.mrb[0].mxu0 %v619
    %v702 = vpop.f32.mrb[0].mxu0
    %v703 = vadd.f32 0.0, %v702
    %v704 = vpop.f32.mrb[0].mxu0
    %v705 = vpop.f32.mrb[0].mxu0
    %v706 = vadd.f32 0.0, %v705
    %v707 = vpop.f32.mrb[0].mxu0
    %708 = vdwg.mxu0
    %v725 = vunpack.c.l.b16 %v585
    %v726 = vunpack.c.l.b16 %v586
    %v727 = vunpack.c.l.b16 %v587
    %v728 = vunpack.c.l.b16 %v588
    %v729 = vunpack.c.l.b16 %v589
    %v730 = vunpack.c.l.b16 %v590
    %v731 = vunpack.c.l.b16 %v591
    %v732 = vunpack.c.l.b16 %v592
    %v733 = vunpack.c.l.b16 %v593
    %v734 = vunpack.c.l.b16 %v594
    %v735 = vunpack.c.l.b16 %v595
    %v736 = vunpack.c.l.b16 %v596
    %v737 = vunpack.c.l.b16 %v597
    %v738 = vunpack.c.l.b16 %v598
    %v739 = vunpack.c.l.b16 %v599
    %v740 = vunpack.c.l.b16 %v600
    %v741 = vpack.c.b16 %v726, %v725
    %v742 = vpack.c.b16 %v728, %v727
    %v743 = vpack.c.b16 %v730, %v729
    %v744 = vpack.c.b16 %v732, %v731
    %v745 = vpack.c.b16 %v734, %v733
    %v746 = vpack.c.b16 %v736, %v735
    %v747 = vpack.c.b16 %v738, %v737
    %v748 = vpack.c.b16 %v740, %v739
    %757 = vmatprep.subr.bf16.mxu0 0
    %758 = vmatpush1.bf16.msra.mxu0 %v741
    %759 = vmatprep.subr.bf16.mxu0 0
    %760 = vmatpush1.bf16.msra.mxu0 %v742
    %761 = vmatprep.subr.bf16.mxu0 0
    %762 = vmatpush1.bf16.msra.mxu0 %v743
    %763 = vmatprep.subr.bf16.mxu0 0
    %764 = vmatpush1.bf16.msra.mxu0 %v744
    %765 = vmatprep.subr.bf16.mxu0 0
    %766 = vmatpush1.bf16.msra.mxu0 %v745
    %767 = vmatprep.subr.bf16.mxu0 0
    %768 = vmatpush1.bf16.msra.mxu0 %v746
    %769 = vmatprep.subr.bf16.mxu0 0
    %770 = vmatpush1.bf16.msra.mxu0 %v747
    %771 = vmatprep.subr.bf16.mxu0 0
    %772 = vmatpush1.bf16.msra.mxu0 %v748
    %773 = vmatprep.subr.bf16.mxu0 0
    %774 = vmatpush1.bf16.msra.mxu0 0
    %775 = vmatprep.subr.bf16.mxu0 0
    %776 = vmatpush1.bf16.msra.mxu0 0
    %777 = vmatprep.subr.bf16.mxu0 0
    %778 = vmatpush1.bf16.msra.mxu0 0
    %779 = vmatprep.subr.bf16.mxu0 0
    %780 = vmatpush1.bf16.msra.mxu0 0
    %781 = vmatprep.subr.bf16.mxu0 0
    %782 = vmatpush1.bf16.msra.mxu0 0
    %783 = vmatprep.subr.bf16.mxu0 0
    %784 = vmatpush1.bf16.msra.mxu0 0
    %785 = vmatprep.subr.bf16.mxu0 0
    %786 = vmatpush1.bf16.msra.mxu0 0
    %787 = vmatprep.subr.bf16.mxu0 0
    %788 = vmatpush1.bf16.msra.mxu0 0
    %789 = vmatprep.mubr.bf16.mxu0 0
    %790 = vmatmul.mubr.bf16.gmra.mrb[0].mxu0 %v601
    %v791 = vpop.f32.mrb[0].mxu0
    %v792 = vadd.f32 %v703, %v791
    %v793 = vpop.f32.mrb[0].mxu0
    %v794 = vpop.f32.mrb[0].mxu0
    %v795 = vadd.f32 %v706, %v794
    %v796 = vpop.f32.mrb[0].mxu0
    %797 = vdwg.mxu0
    %v798 = vrot.slane %v577, 1
    %v799 = vrot.slane %v578, 1
    %v800 = vsel %vm348, %v798, %v799
    %v801 = vsel %vm348, %v799, %v798
    %v802 = vsel %vm89, 0.0, %v800
    %v803 = vsel %vm90, 0.0, %v801
    %s804 = scalar_lea.vmem %s4, 128
    %v805 = vld [vmem:[%s804] sm:$0xf]
    %v806 = vld [vmem:[%s804 + $0x4] sm:$0xf]
    %v807 = vld [vmem:[%s804 + $0x8] sm:$0xf]
    %v808 = vld [vmem:[%s804 + $0xc] sm:$0xf]
    %v809 = vld [vmem:[%s804 + $0x10] sm:$0xf]
    %v810 = vld [vmem:[%s804 + $0x14] sm:$0xf]
    %v811 = vld [vmem:[%s804 + $0x18] sm:$0xf]
    %v812 = vld [vmem:[%s804 + $0x1c] sm:$0xf]
    %v813 = vld [vmem:[%s804 + $0x20] sm:$0xf]
    %v814 = vld [vmem:[%s804 + $0x24] sm:$0xf]
    %v815 = vld [vmem:[%s804 + $0x28] sm:$0xf]
    %v816 = vld [vmem:[%s804 + $0x2c] sm:$0xf]
    %v817 = vld [vmem:[%s804 + $0x30] sm:$0xf]
    %v818 = vld [vmem:[%s804 + $0x34] sm:$0xf]
    %v819 = vld [vmem:[%s804 + $0x38] sm:$0xf]
    %v820 = vld [vmem:[%s804 + $0x3c] sm:$0xf]
    %v821 = vpack.c.bf16 %v803, %v802
    %v838 = vunpack.c.l.b16 %v805
    %v839 = vunpack.c.l.b16 %v806
    %v840 = vunpack.c.l.b16 %v807
    %v841 = vunpack.c.l.b16 %v808
    %v842 = vunpack.c.l.b16 %v809
    %v843 = vunpack.c.l.b16 %v810
    %v844 = vunpack.c.l.b16 %v811
    %v845 = vunpack.c.l.b16 %v812
    %v846 = vunpack.c.l.b16 %v813
    %v847 = vunpack.c.l.b16 %v814
    %v848 = vunpack.c.l.b16 %v815
    %v849 = vunpack.c.l.b16 %v816
    %v850 = vunpack.c.l.b16 %v817
    %v851 = vunpack.c.l.b16 %v818
    %v852 = vunpack.c.l.b16 %v819
    %v853 = vunpack.c.l.b16 %v820
    %v854 = vpack.c.b16 %v839, %v838
    %v855 = vpack.c.b16 %v841, %v840
    %v856 = vpack.c.b16 %v843, %v842
    %v857 = vpack.c.b16 %v845, %v844
    %v858 = vpack.c.b16 %v847, %v846
    %v859 = vpack.c.b16 %v849, %v848
    %v860 = vpack.c.b16 %v851, %v850
    %v861 = vpack.c.b16 %v853, %v852
    %870 = vmatprep.subr.bf16.mxu0 0
    %871 = vmatpush1.bf16.msra.mxu0 %v854
    %872 = vmatprep.subr.bf16.mxu0 0
    %873 = vmatpush1.bf16.msra.mxu0 %v855
    %874 = vmatprep.subr.bf16.mxu0 0
    %875 = vmatpush1.bf16.msra.mxu0 %v856
    %876 = vmatprep.subr.bf16.mxu0 0
    %877 = vmatpush1.bf16.msra.mxu0 %v857
    %878 = vmatprep.subr.bf16.mxu0 0
    %879 = vmatpush1.bf16.msra.mxu0 %v858
    %880 = vmatprep.subr.bf16.mxu0 0
    %881 = vmatpush1.bf16.msra.mxu0 %v859
    %882 = vmatprep.subr.bf16.mxu0 0
    %883 = vmatpush1.bf16.msra.mxu0 %v860
    %884 = vmatprep.subr.bf16.mxu0 0
    %885 = vmatpush1.bf16.msra.mxu0 %v861
    %886 = vmatprep.subr.bf16.mxu0 0
    %887 = vmatpush1.bf16.msra.mxu0 0
    %888 = vmatprep.subr.bf16.mxu0 0
    %889 = vmatpush1.bf16.msra.mxu0 0
    %890 = vmatprep.subr.bf16.mxu0 0
    %891 = vmatpush1.bf16.msra.mxu0 0
    %892 = vmatprep.subr.bf16.mxu0 0
    %893 = vmatpush1.bf16.msra.mxu0 0
    %894 = vmatprep.subr.bf16.mxu0 0
    %895 = vmatpush1.bf16.msra.mxu0 0
    %896 = vmatprep.subr.bf16.mxu0 0
    %897 = vmatpush1.bf16.msra.mxu0 0
    %898 = vmatprep.subr.bf16.mxu0 0
    %899 = vmatpush1.bf16.msra.mxu0 0
    %900 = vmatprep.subr.bf16.mxu0 0
    %901 = vmatpush1.bf16.msra.mxu0 0
    %902 = vmatprep.mubr.bf16.mxu0 0
    %903 = vmatmul.mubr.bf16.gmra.mrb[0].mxu0 %v821
    %v904 = vpop.f32.mrb[0].mxu0
    %v905 = vadd.f32 0.0, %v904
    %v906 = vpop.f32.mrb[0].mxu0
    %v907 = vpop.f32.mrb[0].mxu0
    %v908 = vadd.f32 0.0, %v907
    %v909 = vpop.f32.mrb[0].mxu0
    %910 = vdwg.mxu0
    %v911 = vadd.f32 %v792, %v905
    %v912 = vadd.f32 %v795, %v908
    %v913 = vld [vmem:[%s6 + $0x1] sm:$0x1]
    %v914 = vlaneseq
    %v915 = vshrl.u32 %v914, 7
    %v916 = vsub.s32 0, %v915
    %v917 = vrot.slane %v913, %v916
    %v918 = vadd.f32 %v911, %v917
    %v919 = vadd.f32 %v912, %v917
    %v920 = vmax.f32 %v918, 0.0
    %v921 = vmax.f32 %v919, 0.0
    %v922 = vpack.c.bf16 %v461, %v460
    %v923 = vpack.c.bf16 %v576, %v575
    %v924 = vpack.c.bf16 %v921, %v920
    %v925 = vld [vmem:[#allocation7] sm:$0xf]
    %v926 = vld [vmem:[#allocation7 + $0x4] sm:$0xf]
    %v927 = vld [vmem:[#allocation7 + $0x8] sm:$0xf]
    %v928 = vld [vmem:[#allocation7 + $0xc] sm:$0xf]
    %v929 = vld [vmem:[#allocation7 + $0x10] sm:$0xf]
    %v930 = vld [vmem:[#allocation7 + $0x14] sm:$0xf]
    %v931 = vld [vmem:[#allocation7 + $0x18] sm:$0xf]
    %v932 = vld [vmem:[#allocation7 + $0x1c] sm:$0xf]
    %v933 = vld [vmem:[#allocation7 + $0x20] sm:$0xf]
    %v934 = vld [vmem:[#allocation7 + $0x24] sm:$0xf]
    %v935 = vld [vmem:[#allocation7 + $0x28] sm:$0xf]
    %v936 = vld [vmem:[#allocation7 + $0x2c] sm:$0xf]
    %v937 = vld [vmem:[#allocation7 + $0x30] sm:$0xf]
    %v938 = vld [vmem:[#allocation7 + $0x34] sm:$0xf]
    %v939 = vld [vmem:[#allocation7 + $0x38] sm:$0xf]
    %v940 = vld [vmem:[#allocation7 + $0x3c] sm:$0xf]
    %v941 = vld [vmem:[#allocation7 + $0x40] sm:$0xf]
    %v942 = vld [vmem:[#allocation7 + $0x44] sm:$0xf]
    %v943 = vld [vmem:[#allocation7 + $0x48] sm:$0xf]
    %v944 = vld [vmem:[#allocation7 + $0x4c] sm:$0xf]
    %v945 = vld [vmem:[#allocation7 + $0x50] sm:$0xf]
    %v946 = vld [vmem:[#allocation7 + $0x54] sm:$0xf]
    %v947 = vld [vmem:[#allocation7 + $0x58] sm:$0xf]
    %v948 = vld [vmem:[#allocation7 + $0x5c] sm:$0xf]
    %v949 = vld [vmem:[#allocation7 + $0x60] sm:$0xf]
    %v950 = vld [vmem:[#allocation7 + $0x64] sm:$0xf]
    %v951 = vld [vmem:[#allocation7 + $0x68] sm:$0xf]
    %v952 = vld [vmem:[#allocation7 + $0x6c] sm:$0xf]
    %v953 = vld [vmem:[#allocation7 + $0x70] sm:$0xf]
    %v954 = vld [vmem:[#allocation7 + $0x74] sm:$0xf]
    %v955 = vld [vmem:[#allocation7 + $0x78] sm:$0xf]
    %v956 = vld [vmem:[#allocation7 + $0x7c] sm:$0xf]
    %v957 = vld [vmem:[#allocation7 + $0x80] sm:$0xf]
    %v958 = vld [vmem:[#allocation7 + $0x84] sm:$0xf]
    %v959 = vld [vmem:[#allocation7 + $0x88] sm:$0xf]
    %v960 = vld [vmem:[#allocation7 + $0x8c] sm:$0xf]
    %v961 = vld [vmem:[#allocation7 + $0x90] sm:$0xf]
    %v962 = vld [vmem:[#allocation7 + $0x94] sm:$0xf]
    %v963 = vld [vmem:[#allocation7 + $0x98] sm:$0xf]
    %v964 = vld [vmem:[#allocation7 + $0x9c] sm:$0xf]
    %v965 = vld [vmem:[#allocation7 + $0xa0] sm:$0xf]
    %v966 = vld [vmem:[#allocation7 + $0xa4] sm:$0xf]
    %v967 = vld [vmem:[#allocation7 + $0xa8] sm:$0xf]
    %v968 = vld [vmem:[#allocation7 + $0xac] sm:$0xf]
    %v969 = vld [vmem:[#allocation7 + $0xb0] sm:$0xf]
    %v970 = vld [vmem:[#allocation7 + $0xb4] sm:$0xf]
    %v971 = vld [vmem:[#allocation7 + $0xb8] sm:$0xf]
    %v972 = vld [vmem:[#allocation7 + $0xbc] sm:$0xf]
    %v973 = vld [vmem:[%s6 + $0x2] sm:$0x1]
    %v974 = vlaneseq
    %v975 = vshrl.u32 %v974, 7
    %v976 = vsub.s32 0, %v975
    %v977 = vrot.slane %v973, %v976
    %v1026 = vunpack.c.l.b16 %v925
    %v1027 = vunpack.c.l.b16 %v926
    %v1028 = vunpack.c.l.b16 %v927
    %v1029 = vunpack.c.l.b16 %v928
    %v1030 = vunpack.c.l.b16 %v929
    %v1031 = vunpack.c.l.b16 %v930
    %v1032 = vunpack.c.l.b16 %v931
    %v1033 = vunpack.c.l.b16 %v932
    %v1034 = vunpack.c.l.b16 %v933
    %v1035 = vunpack.c.l.b16 %v934
    %v1036 = vunpack.c.l.b16 %v935
    %v1037 = vunpack.c.l.b16 %v936
    %v1038 = vunpack.c.l.b16 %v937
    %v1039 = vunpack.c.l.b16 %v938
    %v1040 = vunpack.c.l.b16 %v939
    %v1041 = vunpack.c.l.b16 %v940
    %v1042 = vunpack.c.l.b16 %v941
    %v1043 = vunpack.c.l.b16 %v942
    %v1044 = vunpack.c.l.b16 %v943
    %v1045 = vunpack.c.l.b16 %v944
    %v1046 = vunpack.c.l.b16 %v945
    %v1047 = vunpack.c.l.b16 %v946
    %v1048 = vunpack.c.l.b16 %v947
    %v1049 = vunpack.c.l.b16 %v948
    %v1050 = vunpack.c.l.b16 %v949
    %v1051 = vunpack.c.l.b16 %v950
    %v1052 = vunpack.c.l.b16 %v951
    %v1053 = vunpack.c.l.b16 %v952
    %v1054 = vunpack.c.l.b16 %v953
    %v1055 = vunpack.c.l.b16 %v954
    %v1056 = vunpack.c.l.b16 %v955
    %v1057 = vunpack.c.l.b16 %v956
    %v1058 = vunpack.c.l.b16 %v957
    %v1059 = vunpack.c.l.b16 %v958
    %v1060 = vunpack.c.l.b16 %v959
    %v1061 = vunpack.c.l.b16 %v960
    %v1062 = vunpack.c.l.b16 %v961
    %v1063 = vunpack.c.l.b16 %v962
    %v1064 = vunpack.c.l.b16 %v963
    %v1065 = vunpack.c.l.b16 %v964
    %v1066 = vunpack.c.l.b16 %v965
    %v1067 = vunpack.c.l.b16 %v966
    %v1068 = vunpack.c.l.b16 %v967
    %v1069 = vunpack.c.l.b16 %v968
    %v1070 = vunpack.c.l.b16 %v969
    %v1071 = vunpack.c.l.b16 %v970
    %v1072 = vunpack.c.l.b16 %v971
    %v1073 = vunpack.c.l.b16 %v972
    %v1074 = vpack.c.b16 %v1027, %v1026
    %v1075 = vpack.c.b16 %v1029, %v1028
    %v1076 = vpack.c.b16 %v1031, %v1030
    %v1077 = vpack.c.b16 %v1033, %v1032
    %v1078 = vpack.c.b16 %v1035, %v1034
    %v1079 = vpack.c.b16 %v1037, %v1036
    %v1080 = vpack.c.b16 %v1039, %v1038
    %v1081 = vpack.c.b16 %v1041, %v1040
    %v1082 = vpack.c.b16 %v1043, %v1042
    %v1083 = vpack.c.b16 %v1045, %v1044
    %v1084 = vpack.c.b16 %v1047, %v1046
    %v1085 = vpack.c.b16 %v1049, %v1048
    %v1086 = vpack.c.b16 %v1051, %v1050
    %v1087 = vpack.c.b16 %v1053, %v1052
    %v1088 = vpack.c.b16 %v1055, %v1054
    %v1089 = vpack.c.b16 %v1057, %v1056
    %v1090 = vpack.c.b16 %v1059, %v1058
    %v1091 = vpack.c.b16 %v1061, %v1060
    %v1092 = vpack.c.b16 %v1063, %v1062
    %v1093 = vpack.c.b16 %v1065, %v1064
    %v1094 = vpack.c.b16 %v1067, %v1066
    %v1095 = vpack.c.b16 %v1069, %v1068
    %v1096 = vpack.c.b16 %v1071, %v1070
    %v1097 = vpack.c.b16 %v1073, %v1072
    %1122 = vmatprep.subr.bf16.mxu0 0
    %1123 = vmatpush1.bf16.msra.mxu0 %v1074
    %1124 = vmatprep.subr.bf16.mxu0 0
    %1125 = vmatpush1.bf16.msra.mxu0 %v1075
    %1126 = vmatprep.subr.bf16.mxu0 0
    %1127 = vmatpush1.bf16.msra.mxu0 %v1076
    %1128 = vmatprep.subr.bf16.mxu0 0
    %1129 = vmatpush1.bf16.msra.mxu0 %v1077
    %1130 = vmatprep.subr.bf16.mxu0 0
    %1131 = vmatpush1.bf16.msra.mxu0 %v1078
    %1132 = vmatprep.subr.bf16.mxu0 0
    %1133 = vmatpush1.bf16.msra.mxu0 %v1079
    %1134 = vmatprep.subr.bf16.mxu0 0
    %1135 = vmatpush1.bf16.msra.mxu0 %v1080
    %1136 = vmatprep.subr.bf16.mxu0 0
    %1137 = vmatpush1.bf16.msra.mxu0 %v1081
    %1138 = vmatprep.subr.bf16.mxu0 0
    %1139 = vmatpush1.bf16.msra.mxu0 %v1082
    %1140 = vmatprep.subr.bf16.mxu0 0
    %1141 = vmatpush1.bf16.msra.mxu0 %v1083
    %1142 = vmatprep.subr.bf16.mxu0 0
    %1143 = vmatpush1.bf16.msra.mxu0 %v1084
    %1144 = vmatprep.subr.bf16.mxu0 0
    %1145 = vmatpush1.bf16.msra.mxu0 %v1085
    %1146 = vmatprep.subr.bf16.mxu0 0
    %1147 = vmatpush1.bf16.msra.mxu0 %v1086
    %1148 = vmatprep.subr.bf16.mxu0 0
    %1149 = vmatpush1.bf16.msra.mxu0 %v1087
    %1150 = vmatprep.subr.bf16.mxu0 0
    %1151 = vmatpush1.bf16.msra.mxu0 %v1088
    %1152 = vmatprep.subr.bf16.mxu0 0
    %1153 = vmatpush1.bf16.msra.mxu0 %v1089
    %1154 = vmatprep.mubr.bf16.mxu0 %v923
    %1155 = vmatmul.mubr.bf16.gmra.mrb[0].mxu0 %v922
    %v1156 = vpop.f32.mrb[0].mxu0
    %v1157 = vadd.f32 %v977, %v1156
    %v1158 = vpop.f32.mrb[0].mxu0
    %v1159 = vpop.f32.mrb[0].mxu0
    %v1160 = vadd.f32 %v977, %v1159
    %v1161 = vpop.f32.mrb[0].mxu0
    %1162 = vdwg.mxu0
    %1163 = vmatprep.subr.bf16.mxu0 0
    %1164 = vmatpush1.bf16.msra.mxu0 %v1090
    %1165 = vmatprep.subr.bf16.mxu0 0
    %1166 = vmatpush1.bf16.msra.mxu0 %v1091
    %1167 = vmatprep.subr.bf16.mxu0 0
    %1168 = vmatpush1.bf16.msra.mxu0 %v1092
    %1169 = vmatprep.subr.bf16.mxu0 0
    %1170 = vmatpush1.bf16.msra.mxu0 %v1093
    %1171 = vmatprep.subr.bf16.mxu0 0
    %1172 = vmatpush1.bf16.msra.mxu0 %v1094
    %1173 = vmatprep.subr.bf16.mxu0 0
    %1174 = vmatpush1.bf16.msra.mxu0 %v1095
    %1175 = vmatprep.subr.bf16.mxu0 0
    %1176 = vmatpush1.bf16.msra.mxu0 %v1096
    %1177 = vmatprep.subr.bf16.mxu0 0
    %1178 = vmatpush1.bf16.msra.mxu0 %v1097
    %1179 = vmatprep.subr.bf16.mxu0 0
    %1180 = vmatpush1.bf16.msra.mxu0 0
    %1181 = vmatprep.subr.bf16.mxu0 0
    %1182 = vmatpush1.bf16.msra.mxu0 0
    %1183 = vmatprep.subr.bf16.mxu0 0
    %1184 = vmatpush1.bf16.msra.mxu0 0
    %1185 = vmatprep.subr.bf16.mxu0 0
    %1186 = vmatpush1.bf16.msra.mxu0 0
    %1187 = vmatprep.subr.bf16.mxu0 0
    %1188 = vmatpush1.bf16.msra.mxu0 0
    %1189 = vmatprep.subr.bf16.mxu0 0
    %1190 = vmatpush1.bf16.msra.mxu0 0
    %1191 = vmatprep.subr.bf16.mxu0 0
    %1192 = vmatpush1.bf16.msra.mxu0 0
    %1193 = vmatprep.subr.bf16.mxu0 0
    %1194 = vmatpush1.bf16.msra.mxu0 0
    %1195 = vmatprep.mubr.bf16.mxu0 0
    %1196 = vmatmul.mubr.bf16.gmra.mrb[0].mxu0 %v924
    %v1197 = vpop.f32.mrb[0].mxu0
    %v1198 = vadd.f32 %v1157, %v1197
    %v1199 = vpop.f32.mrb[0].mxu0
    %v1200 = vpop.f32.mrb[0].mxu0
    %v1201 = vadd.f32 %v1160, %v1200
    %v1202 = vpop.f32.mrb[0].mxu0
    %1203 = vdwg.mxu0
    %v1204 = vadd.f32 %v225, %v225
    %v1205 = vadd.f32 %v229, %v229
    %s1206 = scalar_lea.vmem [#allocation6], 64
    %v1207 = vld [vmem:[%s1206] sm:$0xf]
    %v1208 = vld [vmem:[%s1206 + $0x4] sm:$0xf]
    %v1209 = vld [vmem:[%s1206 + $0x8] sm:$0xf]
    %v1210 = vld [vmem:[%s1206 + $0xc] sm:$0xf]
    %v1211 = vld [vmem:[%s1206 + $0x10] sm:$0xf]
    %v1212 = vld [vmem:[%s1206 + $0x14] sm:$0xf]
    %v1213 = vld [vmem:[%s1206 + $0x18] sm:$0xf]
    %v1214 = vld [vmem:[%s1206 + $0x1c] sm:$0xf]
    %v1215 = vld [vmem:[%s1206 + $0x20] sm:$0xf]
    %v1216 = vld [vmem:[%s1206 + $0x24] sm:$0xf]
    %v1217 = vld [vmem:[%s1206 + $0x28] sm:$0xf]
    %v1218 = vld [vmem:[%s1206 + $0x2c] sm:$0xf]
    %v1219 = vld [vmem:[%s1206 + $0x30] sm:$0xf]
    %v1220 = vld [vmem:[%s1206 + $0x34] sm:$0xf]
    %v1221 = vld [vmem:[%s1206 + $0x38] sm:$0xf]
    %v1222 = vld [vmem:[%s1206 + $0x3c] sm:$0xf]
    %v1223 = vpack.c.bf16 %v1205, %v1204
    %v1224 = vld [vmem:[%s6 + $0x3] sm:$0x1]
    %v1225 = vlaneseq
    %v1226 = vshrl.u32 %v1225, 7
    %v1227 = vsub.s32 0, %v1226
    %v1228 = vrot.slane %v1224, %v1227
    %v1245 = vunpack.c.l.b16 %v1207
    %v1246 = vunpack.c.l.b16 %v1208
    %v1247 = vunpack.c.l.b16 %v1209
    %v1248 = vunpack.c.l.b16 %v1210
    %v1249 = vunpack.c.l.b16 %v1211
    %v1250 = vunpack.c.l.b16 %v1212
    %v1251 = vunpack.c.l.b16 %v1213
    %v1252 = vunpack.c.l.b16 %v1214
    %v1253 = vunpack.c.l.b16 %v1215
    %v1254 = vunpack.c.l.b16 %v1216
    %v1255 = vunpack.c.l.b16 %v1217
    %v1256 = vunpack.c.l.b16 %v1218
    %v1257 = vunpack.c.l.b16 %v1219
    %v1258 = vunpack.c.l.b16 %v1220
    %v1259 = vunpack.c.l.b16 %v1221
    %v1260 = vunpack.c.l.b16 %v1222
    %v1261 = vpack.c.b16 %v1246, %v1245
    %v1262 = vpack.c.b16 %v1248, %v1247
    %v1263 = vpack.c.b16 %v1250, %v1249
    %v1264 = vpack.c.b16 %v1252, %v1251
    %v1265 = vpack.c.b16 %v1254, %v1253
    %v1266 = vpack.c.b16 %v1256, %v1255
    %v1267 = vpack.c.b16 %v1258, %v1257
    %v1268 = vpack.c.b16 %v1260, %v1259
    %1277 = vmatprep.subr.bf16.mxu0 0
    %1278 = vmatpush1.bf16.msra.mxu0 %v1261
    %1279 = vmatprep.subr.bf16.mxu0 0
    %1280 = vmatpush1.bf16.msra.mxu0 %v1262
    %1281 = vmatprep.subr.bf16.mxu0 0
    %1282 = vmatpush1.bf16.msra.mxu0 %v1263
    %1283 = vmatprep.subr.bf16.mxu0 0
    %1284 = vmatpush1.bf16.msra.mxu0 %v1264
    %1285 = vmatprep.subr.bf16.mxu0 0
    %1286 = vmatpush1.bf16.msra.mxu0 %v1265
    %1287 = vmatprep.subr.bf16.mxu0 0
    %1288 = vmatpush1.bf16.msra.mxu0 %v1266
    %1289 = vmatprep.subr.bf16.mxu0 0
    %1290 = vmatpush1.bf16.msra.mxu0 %v1267
    %1291 = vmatprep.subr.bf16.mxu0 0
    %1292 = vmatpush1.bf16.msra.mxu0 %v1268
    %1293 = vmatprep.subr.bf16.mxu0 0
    %1294 = vmatpush1.bf16.msra.mxu0 0
    %1295 = vmatprep.subr.bf16.mxu0 0
    %1296 = vmatpush1.bf16.msra.mxu0 0
    %1297 = vmatprep.subr.bf16.mxu0 0
    %1298 = vmatpush1.bf16.msra.mxu0 0
    %1299 = vmatprep.subr.bf16.mxu0 0
    %1300 = vmatpush1.bf16.msra.mxu0 0
    %1301 = vmatprep.subr.bf16.mxu0 0
    %1302 = vmatpush1.bf16.msra.mxu0 0
    %1303 = vmatprep.subr.bf16.mxu0 0
    %1304 = vmatpush1.bf16.msra.mxu0 0
    %1305 = vmatprep.subr.bf16.mxu0 0
    %1306 = vmatpush1.bf16.msra.mxu0 0
    %1307 = vmatprep.subr.bf16.mxu0 0
    %1308 = vmatpush1.bf16.msra.mxu0 0
    %1309 = vmatprep.mubr.bf16.mxu0 0
    %1310 = vmatmul.mubr.bf16.gmra.mrb[0].mxu0 %v1223
    %v1311 = vpop.f32.mrb[0].mxu0
    %v1312 = vadd.f32 %v1228, %v1311
    %v1313 = vpop.f32.mrb[0].mxu0
    %v1314 = vpop.f32.mrb[0].mxu0
    %v1315 = vadd.f32 %v1228, %v1314
    %v1316 = vpop.f32.mrb[0].mxu0
    %1317 = vdwg.mxu0
    %v1318 = vmax.f32 %v1312, 0.0
    %v1319 = vmax.f32 %v1315, 0.0
    %v1320 = vadd.f32 %v1204, %v1318
    %v1321 = vadd.f32 %v1205, %v1319
    %v1322 = vrot.slane %v1320, 7
    %v1323 = vrot.slane %v1321, 7
    %v1324 = vsel %vm233, %v1322, %v1323
    %v1325 = vsel %vm233, %v1323, %v1322
    %v1326 = vsel %vm87, 0.0, %v1325
    %v1327 = vsel %vm88, 0.0, %v1324
    %s1328 = scalar_lea.vmem %s4, 192
    %v1329 = vld [vmem:[%s1328] sm:$0xf]
    %v1330 = vld [vmem:[%s1328 + $0x4] sm:$0xf]
    %v1331 = vld [vmem:[%s1328 + $0x8] sm:$0xf]
    %v1332 = vld [vmem:[%s1328 + $0xc] sm:$0xf]
    %v1333 = vld [vmem:[%s1328 + $0x10] sm:$0xf]
    %v1334 = vld [vmem:[%s1328 + $0x14] sm:$0xf]
    %v1335 = vld [vmem:[%s1328 + $0x18] sm:$0xf]
    %v1336 = vld [vmem:[%s1328 + $0x1c] sm:$0xf]
    %v1337 = vld [vmem:[%s1328 + $0x20] sm:$0xf]
    %v1338 = vld [vmem:[%s1328 + $0x24] sm:$0xf]
    %v1339 = vld [vmem:[%s1328 + $0x28] sm:$0xf]
    %v1340 = vld [vmem:[%s1328 + $0x2c] sm:$0xf]
    %v1341 = vld [vmem:[%s1328 + $0x30] sm:$0xf]
    %v1342 = vld [vmem:[%s1328 + $0x34] sm:$0xf]
    %v1343 = vld [vmem:[%s1328 + $0x38] sm:$0xf]
    %v1344 = vld [vmem:[%s1328 + $0x3c] sm:$0xf]
    %v1345 = vpack.c.bf16 %v1327, %v1326
    %s1346 = scalar_lea.vmem %s4, 256
    %v1347 = vld [vmem:[%s1346] sm:$0xf]
    %v1348 = vld [vmem:[%s1346 + $0x4] sm:$0xf]
    %v1349 = vld [vmem:[%s1346 + $0x8] sm:$0xf]
    %v1350 = vld [vmem:[%s1346 + $0xc] sm:$0xf]
    %v1351 = vld [vmem:[%s1346 + $0x10] sm:$0xf]
    %v1352 = vld [vmem:[%s1346 + $0x14] sm:$0xf]
    %v1353 = vld [vmem:[%s1346 + $0x18] sm:$0xf]
    %v1354 = vld [vmem:[%s1346 + $0x1c] sm:$0xf]
    %v1355 = vld [vmem:[%s1346 + $0x20] sm:$0xf]
    %v1356 = vld [vmem:[%s1346 + $0x24] sm:$0xf]
    %v1357 = vld [vmem:[%s1346 + $0x28] sm:$0xf]
    %v1358 = vld [vmem:[%s1346 + $0x2c] sm:$0xf]
    %v1359 = vld [vmem:[%s1346 + $0x30] sm:$0xf]
    %v1360 = vld [vmem:[%s1346 + $0x34] sm:$0xf]
    %v1361 = vld [vmem:[%s1346 + $0x38] sm:$0xf]
    %v1362 = vld [vmem:[%s1346 + $0x3c] sm:$0xf]
    %v1363 = vpack.c.bf16 %v1321, %v1320
    %v1380 = vunpack.c.l.b16 %v1347
    %v1381 = vunpack.c.l.b16 %v1348
    %v1382 = vunpack.c.l.b16 %v1349
    %v1383 = vunpack.c.l.b16 %v1350
    %v1384 = vunpack.c.l.b16 %v1351
    %v1385 = vunpack.c.l.b16 %v1352
    %v1386 = vunpack.c.l.b16 %v1353
    %v1387 = vunpack.c.l.b16 %v1354
    %v1388 = vunpack.c.l.b16 %v1355
    %v1389 = vunpack.c.l.b16 %v1356
    %v1390 = vunpack.c.l.b16 %v1357
    %v1391 = vunpack.c.l.b16 %v1358
    %v1392 = vunpack.c.l.b16 %v1359
    %v1393 = vunpack.c.l.b16 %v1360
    %v1394 = vunpack.c.l.b16 %v1361
    %v1395 = vunpack.c.l.b16 %v1362
    %v1396 = vpack.c.b16 %v1381, %v1380
    %v1397 = vpack.c.b16 %v1383, %v1382
    %v1398 = vpack.c.b16 %v1385, %v1384
    %v1399 = vpack.c.b16 %v1387, %v1386
    %v1400 = vpack.c.b16 %v1389, %v1388
    %v1401 = vpack.c.b16 %v1391, %v1390
    %v1402 = vpack.c.b16 %v1393, %v1392
    %v1403 = vpack.c.b16 %v1395, %v1394
    %1412 = vmatprep.subr.bf16.mxu0 0
    %1413 = vmatpush1.bf16.msra.mxu0 %v1396
    %1414 = vmatprep.subr.bf16.mxu0 0
    %1415 = vmatpush1.bf16.msra.mxu0 %v1397
    %1416 = vmatprep.subr.bf16.mxu0 0
    %1417 = vmatpush1.bf16.msra.mxu0 %v1398
    %1418 = vmatprep.subr.bf16.mxu0 0
    %1419 = vmatpush1.bf16.msra.mxu0 %v1399
    %1420 = vmatprep.subr.bf16.mxu0 0
    %1421 = vmatpush1.bf16.msra.mxu0 %v1400
    %1422 = vmatprep.subr.bf16.mxu0 0
    %1423 = vmatpush1.bf16.msra.mxu0 %v1401
    %1424 = vmatprep.subr.bf16.mxu0 0
    %1425 = vmatpush1.bf16.msra.mxu0 %v1402
    %1426 = vmatprep.subr.bf16.mxu0 0
    %1427 = vmatpush1.bf16.msra.mxu0 %v1403
    %1428 = vmatprep.subr.bf16.mxu0 0
    %1429 = vmatpush1.bf16.msra.mxu0 0
    %1430 = vmatprep.subr.bf16.mxu0 0
    %1431 = vmatpush1.bf16.msra.mxu0 0
    %1432 = vmatprep.subr.bf16.mxu0 0
    %1433 = vmatpush1.bf16.msra.mxu0 0
    %1434 = vmatprep.subr.bf16.mxu0 0
    %1435 = vmatpush1.bf16.msra.mxu0 0
    %1436 = vmatprep.subr.bf16.mxu0 0
    %1437 = vmatpush1.bf16.msra.mxu0 0
    %1438 = vmatprep.subr.bf16.mxu0 0
    %1439 = vmatpush1.bf16.msra.mxu0 0
    %1440 = vmatprep.subr.bf16.mxu0 0
    %1441 = vmatpush1.bf16.msra.mxu0 0
    %1442 = vmatprep.subr.bf16.mxu0 0
    %1443 = vmatpush1.bf16.msra.mxu0 0
    %1444 = vmatprep.mubr.bf16.mxu0 0
    %1445 = vmatmul.mubr.bf16.gmra.mrb[0].mxu0 %v1363
    %v1446 = vpop.f32.mrb[0].mxu0
    %v1447 = vadd.f32 0.0, %v1446
    %v1448 = vpop.f32.mrb[0].mxu0
    %v1449 = vpop.f32.mrb[0].mxu0
    %v1450 = vadd.f32 0.0, %v1449
    %v1451 = vpop.f32.mrb[0].mxu0
    %1452 = vdwg.mxu0
    %v1469 = vunpack.c.l.b16 %v1329
    %v1470 = vunpack.c.l.b16 %v1330
    %v1471 = vunpack.c.l.b16 %v1331
    %v1472 = vunpack.c.l.b16 %v1332
    %v1473 = vunpack.c.l.b16 %v1333
    %v1474 = vunpack.c.l.b16 %v1334
    %v1475 = vunpack.c.l.b16 %v1335
    %v1476 = vunpack.c.l.b16 %v1336
    %v1477 = vunpack.c.l.b16 %v1337
    %v1478 = vunpack.c.l.b16 %v1338
    %v1479 = vunpack.c.l.b16 %v1339
    %v1480 = vunpack.c.l.b16 %v1340
    %v1481 = vunpack.c.l.b16 %v1341
    %v1482 = vunpack.c.l.b16 %v1342
    %v1483 = vunpack.c.l.b16 %v1343
    %v1484 = vunpack.c.l.b16 %v1344
    %v1485 = vpack.c.b16 %v1470, %v1469
    %v1486 = vpack.c.b16 %v1472, %v1471
    %v1487 = vpack.c.b16 %v1474, %v1473
    %v1488 = vpack.c.b16 %v1476, %v1475
    %v1489 = vpack.c.b16 %v1478, %v1477
    %v1490 = vpack.c.b16 %v1480, %v1479
    %v1491 = vpack.c.b16 %v1482, %v1481
    %v1492 = vpack.c.b16 %v1484, %v1483
    %1501 = vmatprep.subr.bf16.mxu0 0
    %1502 = vmatpush1.bf16.msra.mxu0 %v1485
    %1503 = vmatprep.subr.bf16.mxu0 0
    %1504 = vmatpush1.bf16.msra.mxu0 %v1486
    %1505 = vmatprep.subr.bf16.mxu0 0
    %1506 = vmatpush1.bf16.msra.mxu0 %v1487
    %1507 = vmatprep.subr.bf16.mxu0 0
    %1508 = vmatpush1.bf16.msra.mxu0 %v1488
    %1509 = vmatprep.subr.bf16.mxu0 0
    %1510 = vmatpush1.bf16.msra.mxu0 %v1489
    %1511 = vmatprep.subr.bf16.mxu0 0
    %1512 = vmatpush1.bf16.msra.mxu0 %v1490
    %1513 = vmatprep.subr.bf16.mxu0 0
    %1514 = vmatpush1.bf16.msra.mxu0 %v1491
    %1515 = vmatprep.subr.bf16.mxu0 0
    %1516 = vmatpush1.bf16.msra.mxu0 %v1492
    %1517 = vmatprep.subr.bf16.mxu0 0
    %1518 = vmatpush1.bf16.msra.mxu0 0
    %1519 = vmatprep.subr.bf16.mxu0 0
    %1520 = vmatpush1.bf16.msra.mxu0 0
    %1521 = vmatprep.subr.bf16.mxu0 0
    %1522 = vmatpush1.bf16.msra.mxu0 0
    %1523 = vmatprep.subr.bf16.mxu0 0
    %1524 = vmatpush1.bf16.msra.mxu0 0
    %1525 = vmatprep.subr.bf16.mxu0 0
    %1526 = vmatpush1.bf16.msra.mxu0 0
    %1527 = vmatprep.subr.bf16.mxu0 0
    %1528 = vmatpush1.bf16.msra.mxu0 0
    %1529 = vmatprep.subr.bf16.mxu0 0
    %1530 = vmatpush1.bf16.msra.mxu0 0
    %1531 = vmatprep.subr.bf16.mxu0 0
    %1532 = vmatpush1.bf16.msra.mxu0 0
    %1533 = vmatprep.mubr.bf16.mxu0 0
    %1534 = vmatmul.mubr.bf16.gmra.mrb[0].mxu0 %v1345
    %v1535 = vpop.f32.mrb[0].mxu0
    %v1536 = vadd.f32 %v1447, %v1535
    %v1537 = vpop.f32.mrb[0].mxu0
    %v1538 = vpop.f32.mrb[0].mxu0
    %v1539 = vadd.f32 %v1450, %v1538
    %v1540 = vpop.f32.mrb[0].mxu0
    %1541 = vdwg.mxu0
    %v1542 = vrot.slane %v1320, 1
    %v1543 = vrot.slane %v1321, 1
    %v1544 = vsel %vm348, %v1542, %v1543
    %v1545 = vsel %vm348, %v1543, %v1542
    %v1546 = vsel %vm89, 0.0, %v1544
    %v1547 = vsel %vm90, 0.0, %v1545
    %s1548 = scalar_lea.vmem %s4, 320
    %v1549 = vld [vmem:[%s1548] sm:$0xf]
    %v1550 = vld [vmem:[%s1548 + $0x4] sm:$0xf]
    %v1551 = vld [vmem:[%s1548 + $0x8] sm:$0xf]
    %v1552 = vld [vmem:[%s1548 + $0xc] sm:$0xf]
    %v1553 = vld [vmem:[%s1548 + $0x10] sm:$0xf]
    %v1554 = vld [vmem:[%s1548 + $0x14] sm:$0xf]
    %v1555 = vld [vmem:[%s1548 + $0x18] sm:$0xf]
    %v1556 = vld [vmem:[%s1548 + $0x1c] sm:$0xf]
    %v1557 = vld [vmem:[%s1548 + $0x20] sm:$0xf]
    %v1558 = vld [vmem:[%s1548 + $0x24] sm:$0xf]
    %v1559 = vld [vmem:[%s1548 + $0x28] sm:$0xf]
    %v1560 = vld [vmem:[%s1548 + $0x2c] sm:$0xf]
    %v1561 = vld [vmem:[%s1548 + $0x30] sm:$0xf]
    %v1562 = vld [vmem:[%s1548 + $0x34] sm:$0xf]
    %v1563 = vld [vmem:[%s1548 + $0x38] sm:$0xf]
    %v1564 = vld [vmem:[%s1548 + $0x3c] sm:$0xf]
    %v1565 = vpack.c.bf16 %v1547, %v1546
    %v1582 = vunpack.c.l.b16 %v1549
    %v1583 = vunpack.c.l.b16 %v1550
    %v1584 = vunpack.c.l.b16 %v1551
    %v1585 = vunpack.c.l.b16 %v1552
    %v1586 = vunpack.c.l.b16 %v1553
    %v1587 = vunpack.c.l.b16 %v1554
    %v1588 = vunpack.c.l.b16 %v1555
    %v1589 = vunpack.c.l.b16 %v1556
    %v1590 = vunpack.c.l.b16 %v1557
    %v1591 = vunpack.c.l.b16 %v1558
    %v1592 = vunpack.c.l.b16 %v1559
    %v1593 = vunpack.c.l.b16 %v1560
    %v1594 = vunpack.c.l.b16 %v1561
    %v1595 = vunpack.c.l.b16 %v1562
    %v1596 = vunpack.c.l.b16 %v1563
    %v1597 = vunpack.c.l.b16 %v1564
    %v1598 = vpack.c.b16 %v1583, %v1582
    %v1599 = vpack.c.b16 %v1585, %v1584
    %v1600 = vpack.c.b16 %v1587, %v1586
    %v1601 = vpack.c.b16 %v1589, %v1588
    %v1602 = vpack.c.b16 %v1591, %v1590
    %v1603 = vpack.c.b16 %v1593, %v1592
    %v1604 = vpack.c.b16 %v1595, %v1594
    %v1605 = vpack.c.b16 %v1597, %v1596
    %1614 = vmatprep.subr.bf16.mxu0 0
    %1615 = vmatpush1.bf16.msra.mxu0 %v1598
    %1616 = vmatprep.subr.bf16.mxu0 0
    %1617 = vmatpush1.bf16.msra.mxu0 %v1599
    %1618 = vmatprep.subr.bf16.mxu0 0
    %1619 = vmatpush1.bf16.msra.mxu0 %v1600
    %1620 = vmatprep.subr.bf16.mxu0 0
    %1621 = vmatpush1.bf16.msra.mxu0 %v1601
    %1622 = vmatprep.subr.bf16.mxu0 0
    %1623 = vmatpush1.bf16.msra.mxu0 %v1602
    %1624 = vmatprep.subr.bf16.mxu0 0
    %1625 = vmatpush1.bf16.msra.mxu0 %v1603
    %1626 = vmatprep.subr.bf16.mxu0 0
    %1627 = vmatpush1.bf16.msra.mxu0 %v1604
    %1628 = vmatprep.subr.bf16.mxu0 0
    %1629 = vmatpush1.bf16.msra.mxu0 %v1605
    %1630 = vmatprep.subr.bf16.mxu0 0
    %1631 = vmatpush1.bf16.msra.mxu0 0
    %1632 = vmatprep.subr.bf16.mxu0 0
    %1633 = vmatpush1.bf16.msra.mxu0 0
    %1634 = vmatprep.subr.bf16.mxu0 0
    %1635 = vmatpush1.bf16.msra.mxu0 0
    %1636 = vmatprep.subr.bf16.mxu0 0
    %1637 = vmatpush1.bf16.msra.mxu0 0
    %1638 = vmatprep.subr.bf16.mxu0 0
    %1639 = vmatpush1.bf16.msra.mxu0 0
    %1640 = vmatprep.subr.bf16.mxu0 0
    %1641 = vmatpush1.bf16.msra.mxu0 0
    %1642 = vmatprep.subr.bf16.mxu0 0
    %1643 = vmatpush1.bf16.msra.mxu0 0
    %1644 = vmatprep.subr.bf16.mxu0 0
    %1645 = vmatpush1.bf16.msra.mxu0 0
    %1646 = vmatprep.mubr.bf16.mxu0 0
    %1647 = vmatmul.mubr.bf16.gmra.mrb[0].mxu0 %v1565
    %v1648 = vpop.f32.mrb[0].mxu0
    %v1649 = vadd.f32 0.0, %v1648
    %v1650 = vpop.f32.mrb[0].mxu0
    %v1651 = vpop.f32.mrb[0].mxu0
    %v1652 = vadd.f32 0.0, %v1651
    %v1653 = vpop.f32.mrb[0].mxu0
    %1654 = vdwg.mxu0
    %v1655 = vadd.f32 %v1536, %v1649
    %v1656 = vadd.f32 %v1539, %v1652
    %v1657 = vld [vmem:[%s6 + $0x4] sm:$0x1]
    %v1658 = vlaneseq
    %v1659 = vshrl.u32 %v1658, 7
    %v1660 = vsub.s32 0, %v1659
    %v1661 = vrot.slane %v1657, %v1660
    %v1662 = vadd.f32 %v1655, %v1661
    %v1663 = vadd.f32 %v1656, %v1661
    %v1664 = vmax.f32 %v1662, 0.0
    %v1665 = vmax.f32 %v1663, 0.0
    %v1666 = vpack.c.bf16 %v229, %v225
    %v1667 = vpack.c.bf16 %v1319, %v1318
    %v1668 = vpack.c.bf16 %v1665, %v1664
    %s1669 = scalar_lea.vmem [#allocation7], 192
    %v1670 = vld [vmem:[%s1669] sm:$0xf]
    %v1671 = vld [vmem:[%s1669 + $0x4] sm:$0xf]
    %v1672 = vld [vmem:[%s1669 + $0x8] sm:$0xf]
    %v1673 = vld [vmem:[%s1669 + $0xc] sm:$0xf]
    %v1674 = vld [vmem:[%s1669 + $0x10] sm:$0xf]
    %v1675 = vld [vmem:[%s1669 + $0x14] sm:$0xf]
    %v1676 = vld [vmem:[%s1669 + $0x18] sm:$0xf]
    %v1677 = vld [vmem:[%s1669 + $0x1c] sm:$0xf]
    %v1678 = vld [vmem:[%s1669 + $0x20] sm:$0xf]
    %v1679 = vld [vmem:[%s1669 + $0x24] sm:$0xf]
    %v1680 = vld [vmem:[%s1669 + $0x28] sm:$0xf]
    %v1681 = vld [vmem:[%s1669 + $0x2c] sm:$0xf]
    %v1682 = vld [vmem:[%s1669 + $0x30] sm:$0xf]
    %v1683 = vld [vmem:[%s1669 + $0x34] sm:$0xf]
    %v1684 = vld [vmem:[%s1669 + $0x38] sm:$0xf]
    %v1685 = vld [vmem:[%s1669 + $0x3c] sm:$0xf]
    %v1686 = vld [vmem:[%s1669 + $0x40] sm:$0xf]
    %v1687 = vld [vmem:[%s1669 + $0x44] sm:$0xf]
    %v1688 = vld [vmem:[%s1669 + $0x48] sm:$0xf]
    %v1689 = vld [vmem:[%s1669 + $0x4c] sm:$0xf]
    %v1690 = vld [vmem:[%s1669 + $0x50] sm:$0xf]
    %v1691 = vld [vmem:[%s1669 + $0x54] sm:$0xf]
    %v1692 = vld [vmem:[%s1669 + $0x58] sm:$0xf]
    %v1693 = vld [vmem:[%s1669 + $0x5c] sm:$0xf]
    %v1694 = vld [vmem:[%s1669 + $0x60] sm:$0xf]
    %v1695 = vld [vmem:[%s1669 + $0x64] sm:$0xf]
    %v1696 = vld [vmem:[%s1669 + $0x68] sm:$0xf]
    %v1697 = vld [vmem:[%s1669 + $0x6c] sm:$0xf]
    %v1698 = vld [vmem:[%s1669 + $0x70] sm:$0xf]
    %v1699 = vld [vmem:[%s1669 + $0x74] sm:$0xf]
    %v1700 = vld [vmem:[%s1669 + $0x78] sm:$0xf]
    %v1701 = vld [vmem:[%s1669 + $0x7c] sm:$0xf]
    %v1702 = vld [vmem:[%s1669 + $0x80] sm:$0xf]
    %v1703 = vld [vmem:[%s1669 + $0x84] sm:$0xf]
    %v1704 = vld [vmem:[%s1669 + $0x88] sm:$0xf]
    %v1705 = vld [vmem:[%s1669 + $0x8c] sm:$0xf]
    %v1706 = vld [vmem:[%s1669 + $0x90] sm:$0xf]
    %v1707 = vld [vmem:[%s1669 + $0x94] sm:$0xf]
    %v1708 = vld [vmem:[%s1669 + $0x98] sm:$0xf]
    %v1709 = vld [vmem:[%s1669 + $0x9c] sm:$0xf]
    %v1710 = vld [vmem:[%s1669 + $0xa0] sm:$0xf]
    %v1711 = vld [vmem:[%s1669 + $0xa4] sm:$0xf]
    %v1712 = vld [vmem:[%s1669 + $0xa8] sm:$0xf]
    %v1713 = vld [vmem:[%s1669 + $0xac] sm:$0xf]
    %v1714 = vld [vmem:[%s1669 + $0xb0] sm:$0xf]
    %v1715 = vld [vmem:[%s1669 + $0xb4] sm:$0xf]
    %v1716 = vld [vmem:[%s1669 + $0xb8] sm:$0xf]
    %v1717 = vld [vmem:[%s1669 + $0xbc] sm:$0xf]
    %v1718 = vld [vmem:[%s6 + $0x5] sm:$0x1]
    %v1719 = vlaneseq
    %v1720 = vshrl.u32 %v1719, 7
    %v1721 = vsub.s32 0, %v1720
    %v1722 = vrot.slane %v1718, %v1721
    %v1771 = vunpack.c.l.b16 %v1670
    %v1772 = vunpack.c.l.b16 %v1671
    %v1773 = vunpack.c.l.b16 %v1672
    %v1774 = vunpack.c.l.b16 %v1673
    %v1775 = vunpack.c.l.b16 %v1674
    %v1776 = vunpack.c.l.b16 %v1675
    %v1777 = vunpack.c.l.b16 %v1676
    %v1778 = vunpack.c.l.b16 %v1677
    %v1779 = vunpack.c.l.b16 %v1678
    %v1780 = vunpack.c.l.b16 %v1679
    %v1781 = vunpack.c.l.b16 %v1680
    %v1782 = vunpack.c.l.b16 %v1681
    %v1783 = vunpack.c.l.b16 %v1682
    %v1784 = vunpack.c.l.b16 %v1683
    %v1785 = vunpack.c.l.b16 %v1684
    %v1786 = vunpack.c.l.b16 %v1685
    %v1787 = vunpack.c.l.b16 %v1686
    %v1788 = vunpack.c.l.b16 %v1687
    %v1789 = vunpack.c.l.b16 %v1688
    %v1790 = vunpack.c.l.b16 %v1689
    %v1791 = vunpack.c.l.b16 %v1690
    %v1792 = vunpack.c.l.b16 %v1691
    %v1793 = vunpack.c.l.b16 %v1692
    %v1794 = vunpack.c.l.b16 %v1693
    %v1795 = vunpack.c.l.b16 %v1694
    %v1796 = vunpack.c.l.b16 %v1695
    %v1797 = vunpack.c.l.b16 %v1696
    %v1798 = vunpack.c.l.b16 %v1697
    %v1799 = vunpack.c.l.b16 %v1698
    %v1800 = vunpack.c.l.b16 %v1699
    %v1801 = vunpack.c.l.b16 %v1700
    %v1802 = vunpack.c.l.b16 %v1701
    %v1803 = vunpack.c.l.b16 %v1702
    %v1804 = vunpack.c.l.b16 %v1703
    %v1805 = vunpack.c.l.b16 %v1704
    %v1806 = vunpack.c.l.b16 %v1705
    %v1807 = vunpack.c.l.b16 %v1706
    %v1808 = vunpack.c.l.b16 %v1707
    %v1809 = vunpack.c.l.b16 %v1708
    %v1810 = vunpack.c.l.b16 %v1709
    %v1811 = vunpack.c.l.b16 %v1710
    %v1812 = vunpack.c.l.b16 %v1711
    %v1813 = vunpack.c.l.b16 %v1712
    %v1814 = vunpack.c.l.b16 %v1713
    %v1815 = vunpack.c.l.b16 %v1714
    %v1816 = vunpack.c.l.b16 %v1715
    %v1817 = vunpack.c.l.b16 %v1716
    %v1818 = vunpack.c.l.b16 %v1717
    %v1819 = vpack.c.b16 %v1772, %v1771
    %v1820 = vpack.c.b16 %v1774, %v1773
    %v1821 = vpack.c.b16 %v1776, %v1775
    %v1822 = vpack.c.b16 %v1778, %v1777
    %v1823 = vpack.c.b16 %v1780, %v1779
    %v1824 = vpack.c.b16 %v1782, %v1781
    %v1825 = vpack.c.b16 %v1784, %v1783
    %v1826 = vpack.c.b16 %v1786, %v1785
    %v1827 = vpack.c.b16 %v1788, %v1787
    %v1828 = vpack.c.b16 %v1790, %v1789
    %v1829 = vpack.c.b16 %v1792, %v1791
    %v1830 = vpack.c.b16 %v1794, %v1793
    %v1831 = vpack.c.b16 %v1796, %v1795
    %v1832 = vpack.c.b16 %v1798, %v1797
    %v1833 = vpack.c.b16 %v1800, %v1799
    %v1834 = vpack.c.b16 %v1802, %v1801
    %v1835 = vpack.c.b16 %v1804, %v1803
    %v1836 = vpack.c.b16 %v1806, %v1805
    %v1837 = vpack.c.b16 %v1808, %v1807
    %v1838 = vpack.c.b16 %v1810, %v1809
    %v1839 = vpack.c.b16 %v1812, %v1811
    %v1840 = vpack.c.b16 %v1814, %v1813
    %v1841 = vpack.c.b16 %v1816, %v1815
    %v1842 = vpack.c.b16 %v1818, %v1817
    %1867 = vmatprep.subr.bf16.mxu0 0
    %1868 = vmatpush1.bf16.msra.mxu0 %v1819
    %1869 = vmatprep.subr.bf16.mxu0 0
    %1870 = vmatpush1.bf16.msra.mxu0 %v1820
    %1871 = vmatprep.subr.bf16.mxu0 0
    %1872 = vmatpush1.bf16.msra.mxu0 %v1821
    %1873 = vmatprep.subr.bf16.mxu0 0
    %1874 = vmatpush1.bf16.msra.mxu0 %v1822
    %1875 = vmatprep.subr.bf16.mxu0 0
    %1876 = vmatpush1.bf16.msra.mxu0 %v1823
    %1877 = vmatprep.subr.bf16.mxu0 0
    %1878 = vmatpush1.bf16.msra.mxu0 %v1824
    %1879 = vmatprep.subr.bf16.mxu0 0
    %1880 = vmatpush1.bf16.msra.mxu0 %v1825
    %1881 = vmatprep.subr.bf16.mxu0 0
    %1882 = vmatpush1.bf16.msra.mxu0 %v1826
    %1883 = vmatprep.subr.bf16.mxu0 0
    %1884 = vmatpush1.bf16.msra.mxu0 %v1827
    %1885 = vmatprep.subr.bf16.mxu0 0
    %1886 = vmatpush1.bf16.msra.mxu0 %v1828
    %1887 = vmatprep.subr.bf16.mxu0 0
    %1888 = vmatpush1.bf16.msra.mxu0 %v1829
    %1889 = vmatprep.subr.bf16.mxu0 0
    %1890 = vmatpush1.bf16.msra.mxu0 %v1830
    %1891 = vmatprep.subr.bf16.mxu0 0
    %1892 = vmatpush1.bf16.msra.mxu0 %v1831
    %1893 = vmatprep.subr.bf16.mxu0 0
    %1894 = vmatpush1.bf16.msra.mxu0 %v1832
    %1895 = vmatprep.subr.bf16.mxu0 0
    %1896 = vmatpush1.bf16.msra.mxu0 %v1833
    %1897 = vmatprep.subr.bf16.mxu0 0
    %1898 = vmatpush1.bf16.msra.mxu0 %v1834
    %1899 = vmatprep.mubr.bf16.mxu0 %v1667
    %1900 = vmatmul.mubr.bf16.gmra.mrb[0].mxu0 %v1666
    %v1901 = vpop.f32.mrb[0].mxu0
    %v1902 = vadd.f32 %v1722, %v1901
    %v1903 = vpop.f32.mrb[0].mxu0
    %v1904 = vpop.f32.mrb[0].mxu0
    %v1905 = vadd.f32 %v1722, %v1904
    %v1906 = vpop.f32.mrb[0].mxu0
    %1907 = vdwg.mxu0
    %1908 = vmatprep.subr.bf16.mxu0 0
    %1909 = vmatpush1.bf16.msra.mxu0 %v1835
    %1910 = vmatprep.subr.bf16.mxu0 0
    %1911 = vmatpush1.bf16.msra.mxu0 %v1836
    %1912 = vmatprep.subr.bf16.mxu0 0
    %1913 = vmatpush1.bf16.msra.mxu0 %v1837
    %1914 = vmatprep.subr.bf16.mxu0 0
    %1915 = vmatpush1.bf16.msra.mxu0 %v1838
    %1916 = vmatprep.subr.bf16.mxu0 0
    %1917 = vmatpush1.bf16.msra.mxu0 %v1839
    %1918 = vmatprep.subr.bf16.mxu0 0
    %1919 = vmatpush1.bf16.msra.mxu0 %v1840
    %1920 = vmatprep.subr.bf16.mxu0 0
    %1921 = vmatpush1.bf16.msra.mxu0 %v1841
    %1922 = vmatprep.subr.bf16.mxu0 0
    %1923 = vmatpush1.bf16.msra.mxu0 %v1842
    %1924 = vmatprep.subr.bf16.mxu0 0
    %1925 = vmatpush1.bf16.msra.mxu0 0
    %1926 = vmatprep.subr.bf16.mxu0 0
    %1927 = vmatpush1.bf16.msra.mxu0 0
    %1928 = vmatprep.subr.bf16.mxu0 0
    %1929 = vmatpush1.bf16.msra.mxu0 0
    %1930 = vmatprep.subr.bf16.mxu0 0
    %1931 = vmatpush1.bf16.msra.mxu0 0
    %1932 = vmatprep.subr.bf16.mxu0 0
    %1933 = vmatpush1.bf16.msra.mxu0 0
    %1934 = vmatprep.subr.bf16.mxu0 0
    %1935 = vmatpush1.bf16.msra.mxu0 0
    %1936 = vmatprep.subr.bf16.mxu0 0
    %1937 = vmatpush1.bf16.msra.mxu0 0
    %1938 = vmatprep.subr.bf16.mxu0 0
    %1939 = vmatpush1.bf16.msra.mxu0 0
    %1940 = vmatprep.mubr.bf16.mxu0 0
    %1941 = vmatmul.mubr.bf16.gmra.mrb[0].mxu0 %v1668
    %v1942 = vpop.f32.mrb[0].mxu0
    %v1943 = vadd.f32 %v1902, %v1942
    %v1944 = vpop.f32.mrb[0].mxu0
    %v1945 = vpop.f32.mrb[0].mxu0
    %v1946 = vadd.f32 %v1905, %v1945
    %v1947 = vpop.f32.mrb[0].mxu0
    %1948 = vdwg.mxu0
    %v1949 = vadd.f32 %v1198, %v1943
    %v1950 = vadd.f32 %v1201, %v1946
    %v1951 = vld [vmem:[%s6 + $0x6] sm:$0x1]
    %v1952 = vlaneseq
    %v1953 = vshrl.u32 %v1952, 7
    %v1954 = vsub.s32 0, %v1953
    %v1955 = vrot.slane %v1951, %v1954
    %v1956 = vmul.f32 %v82, %v1955
    %v1957 = vmul.f32 %v83, %v1955
    %v1958 = vadd.f32 %v1949, %v1956
    %v1959 = vadd.f32 %v1950, %v1957
    %v1960 = vld [vmem:[%s6 + $0x7] sm:$0x1]
    %v1961 = vlaneseq
    %v1962 = vshrl.u32 %v1961, 7
    %v1963 = vsub.s32 0, %v1962
    %v1964 = vrot.slane %v1960, %v1963
    %v1965 = vadd.f32 %v1958, %v1964
    %v1966 = vadd.f32 %v1959, %v1964
    %v1967 = vmax.f32 %v1965, 0.0
    %v1968 = vmax.f32 %v1966, 0.0
    %1969 = vst [vmem:[%s7] sm:$0xff] %v1967
    %1970 = vst [vmem:[%s7 + $0x8] sm:$0xff] %v1968
    // Predicated region
    $region46: #{rep_cross_block.1} parent=1 // pred_check
      _
    $region47: #{rep_cross_block.1} parent=1 // pred_check_branch
      %1972 = sbr.rel (0) target = $region49
    $region48: #{rep_cross_block.1} parent=1 // pred_region
      _
    $region49: #{rep_cross_block.1} parent=1 // pred_fallthru
      _
    // Predicated region
    $region50: #{rep_cross_block.1} parent=1 // pred_check
      _
    $region51: #{rep_cross_block.1} parent=1 // pred_check_branch
      %1974 = sbr.rel (0) target = $region53
    $region52: #{rep_cross_block.1} parent=1 // pred_region
      _
    $region53: #{rep_cross_block.1} parent=1 // pred_fallthru
      _
    %1975 = vsyncpa [#allocation3], 1
    %1976 = vsyncpa [#allocation5], 1
    %1977 = vsyncpa [#allocation8], 1

</llo_original>
